<compile_context>
chip_gen: v6e
topology: v6e:2x2x1
jax: 0.10.0
libtpu: 0.0.40
codegen_flags: <defaults>
</compile_context>

<pallas_src>
import math
import jax
import jax.numpy as jnp
from jax.experimental import pallas as pl
from jax.experimental.pallas import tpu as pltpu

# ---------------------------------------------------------------------------
# Model hyper-parameters (small, deterministic synthetic config)
# ---------------------------------------------------------------------------
B = 2            # batch
S = 8            # sequence length
D = 32           # d_model
H = 4            # num_heads
HD = D // H      # head_dim
DFF = 64         # d_ff (real)
DFF_PAD = 128    # d_ff padded to full lane width
LN_EPS = 1e-5

# packed-blob geometry
W_ROWS = 3 * D + DFF_PAD     # wqkv (D) + wo (D) + w1 (D) + w2 (DFF_PAD) rows
W_COLS = 128                 # max(3*D, DFF_PAD)
B_ROWS = 8                   # one row per bias / LN vector
B_COLS = 128


def _layer_norm(x, gamma, beta):
    """LayerNorm over last axis (biased variance, eps=1e-5) — matches nn.LayerNorm."""
    mean = jnp.mean(x, axis=-1, keepdims=True)
    var = jnp.mean((x - mean) ** 2, axis=-1, keepdims=True)
    inv = jax.lax.rsqrt(var + LN_EPS)
    return (x - mean) * inv * gamma + beta


def encoder_layer_kernel(x_ref, w_ref, p_ref, o_ref):
    f32 = jnp.float32
    bf16 = jnp.bfloat16

    # Flattened activations (B*S, D), f32 master copy for residuals / LayerNorm.
    x = x_ref[...]                       # (B*S, D) f32
    xb = x.astype(bf16)

    # ---- static slices of the two parameter blobs ---------------------------
    bqkv = p_ref[0:1, 0:3 * D]           # (1, 96)  (q-slice pre-scaled by 1/sqrt(HD))
    bo = p_ref[1:2, 0:D]                 # (1, 32)
    b1 = p_ref[2:3, 0:DFF_PAD]           # (1, 128) (zero in padded cols)
    b2 = p_ref[3:4, 0:D]                 # (1, 32)
    ln1_g = p_ref[4:5, 0:D]
    ln1_b = p_ref[5:6, 0:D]
    ln2_g = p_ref[6:7, 0:D]
    ln2_b = p_ref[7:8, 0:D]

    # ---- fused QKV projection: one bf16 MXU push, f32 accumulation ----------
    qkv = jnp.dot(xb, w_ref[0:D, 0:3 * D],
                  preferred_element_type=f32) + bqkv                 # (B*S, 3D)

    # ---- attention core: per (batch, head) tiny (S,HD) tiles ----------------
    # (score / context contractions are inherently HD=8 wide at this config;
    #  the per-(b,h) structure is kept only here, per review guidance)
    ctx_rows = []
    for b in range(B):
        r = b * S
        head_ctx = []
        for h in range(H):
            c = h * HD
            q_bh = qkv[r:r + S, c:c + HD].astype(bf16)               # (S, HD)
            k_bh = qkv[r:r + S, D + c:D + c + HD].astype(bf16)       # (S, HD)
            v_bh = qkv[r:r + S, 2 * D + c:2 * D + c + HD].astype(bf16)

            s_bh = jnp.einsum("qe,ke->qk", q_bh, k_bh,
                              preferred_element_type=f32)            # (S, S)
            s_bh = s_bh - jnp.max(s_bh, axis=-1, keepdims=True)
            p_bh = jnp.exp(s_bh)
            p_bh = p_bh / jnp.sum(p_bh, axis=-1, keepdims=True)      # exact softmax (f32)

            head_ctx.append(jnp.dot(p_bh.astype(bf16), v_bh,
                                    preferred_element_type=f32))     # (S, HD)
        ctx_rows.append(jnp.concatenate(head_ctx, axis=-1))          # (S, D)
    ctx = jnp.concatenate(ctx_rows, axis=0).astype(bf16)             # (B*S, D)

    # ---- single dense output projection --------------------------------------
    attn = jnp.dot(ctx, w_ref[D:2 * D, 0:D],
                   preferred_element_type=f32) + bo                  # (B*S, D)

    # residual + LayerNorm 1 (dropout = identity)
    h1 = _layer_norm(x + attn, ln1_g, ln1_b)

    # ---- position-wise feed forward (DFF zero-padded to 128 lanes) -----------
    ff = jnp.dot(h1.astype(bf16), w_ref[2 * D:3 * D, 0:DFF_PAD],
                 preferred_element_type=f32) + b1                    # (B*S, 128)
    ff = jnp.maximum(ff, 0.0)                                        # ReLU
    ff = jnp.dot(ff.astype(bf16), w_ref[3 * D:3 * D + DFF_PAD, 0:D],
                 preferred_element_type=f32) + b2                    # (B*S, D)

    # residual + LayerNorm 2
    out = _layer_norm(h1 + ff, ln2_g, ln2_b)
    o_ref[...] = out.astype(o_ref.dtype)


def transformer_encoder_layer(x, wblob, bblob):
    """x: (B, S, D) float32.  wblob/bblob: packed kernel-layout params (pack_params)."""
    Bx, Sx, Dx = x.shape
    x2 = x.reshape(Bx * Sx, Dx)          # host-side metadata reshape (contiguous)

    out2 = pl.pallas_call(
        encoder_layer_kernel,
        out_shape=jax.ShapeDtypeStruct((Bx * Sx, Dx), x.dtype),
        grid_spec=pltpu.PrefetchScalarGridSpec(
            num_scalar_prefetch=0,
            grid=(1,),                                               # single step: whole problem in VMEM
            in_specs=[
                pl.BlockSpec((Bx * Sx, Dx), lambda i: (0, 0)),       # activations
                pl.BlockSpec((W_ROWS, W_COLS), lambda i: (0, 0)),    # bf16 weight blob
                pl.BlockSpec((B_ROWS, B_COLS), lambda i: (0, 0)),    # f32 bias/LN blob
            ],
            out_specs=pl.BlockSpec((Bx * Sx, Dx), lambda i: (0, 0)),
        ),
        compiler_params=pltpu.CompilerParams(dimension_semantics=("arbitrary",)),
    )(x2, wblob, bblob)
    return out2.reshape(Bx, Sx, Dx)


# ---------------------------------------------------------------------------
# Parameter handling
# ---------------------------------------------------------------------------
def init_params(key):
    """PyTorch-layout params: Linear weights (out, in), biases (out,)."""
    ks = jax.random.split(key, 6)

    def lin(k, out_dim, in_dim):
        bound = 1.0 / math.sqrt(in_dim)
        kw, kb = jax.random.split(k)
        w = jax.random.uniform(kw, (out_dim, in_dim), jnp.float32, -bound, bound)
        b = jax.random.uniform(kb, (out_dim,), jnp.float32, -bound, bound)
        return w, b

    wq, bq = lin(ks[0], D, D)
    wk, bk = lin(ks[1], D, D)
    wv, bv = lin(ks[2], D, D)
    wo, bo = lin(ks[3], D, D)
    w1, b1 = lin(ks[4], DFF, D)
    w2, b2 = lin(ks[5], D, DFF)
    return {
        "wq": wq, "bq": bq, "wk": wk, "bk": bk, "wv": wv, "bv": bv,
        "wo": wo, "bo": bo,
        "ln1_g": jnp.ones((D,), jnp.float32), "ln1_b": jnp.zeros((D,), jnp.float32),
        "w1": w1, "b1": b1, "w2": w2, "b2": b2,
        "ln2_g": jnp.ones((D,), jnp.float32), "ln2_b": jnp.zeros((D,), jnp.float32),
    }


def pack_params(p):
    """Host-side one-time repack into two blobs:
       * wblob (bf16, (224,128)): [Wq^T*scale | Wk^T | Wv^T] rows 0:32 cols 0:96,
         Wo^T rows 32:64, W1^T (DFF zero-padded) rows 64:96, W2^T (padded) rows 96:224.
       * bblob (f32, (8,128)): one row per bias / LayerNorm vector (q-bias pre-scaled).
    """
    bf16 = jnp.bfloat16
    scale = 1.0 / math.sqrt(HD)

    wqkv = jnp.concatenate(
        [jnp.transpose(p["wq"]) * scale, jnp.transpose(p["wk"]), jnp.transpose(p["wv"])],
        axis=1)                                                       # (D, 3D)
    wo_t = jnp.transpose(p["wo"])                                     # (D, D)
    w1_t = jnp.transpose(p["w1"])                                     # (D, DFF)
    w2_t = jnp.transpose(p["w2"])                                     # (DFF, D)

    wblob = jnp.zeros((W_ROWS, W_COLS), bf16)
    wblob = wblob.at[0:D, 0:3 * D].set(wqkv.astype(bf16))
    wblob = wblob.at[D:2 * D, 0:D].set(wo_t.astype(bf16))
    wblob = wblob.at[2 * D:3 * D, 0:DFF].set(w1_t.astype(bf16))       # padded cols stay 0
    wblob = wblob.at[3 * D:3 * D + DFF, 0:D].set(w2_t.astype(bf16))   # padded rows stay 0

    bqkv = jnp.concatenate([p["bq"] * scale, p["bk"], p["bv"]])       # (3D,)
    bblob = jnp.zeros((B_ROWS, B_COLS), jnp.float32)
    bblob = bblob.at[0, 0:3 * D].set(bqkv)
    bblob = bblob.at[1, 0:D].set(p["bo"])
    bblob = bblob.at[2, 0:DFF].set(p["b1"])                           # padded cols stay 0
    bblob = bblob.at[3, 0:D].set(p["b2"])
    bblob = bblob.at[4, 0:D].set(p["ln1_g"])
    bblob = bblob.at[5, 0:D].set(p["ln1_b"])
    bblob = bblob.at[6, 0:D].set(p["ln2_g"])
    bblob = bblob.at[7, 0:D].set(p["ln2_b"])
    return wblob, bblob


# ---------------------------------------------------------------------------
# Pure-JAX reference (f32) for correctness check
# ---------------------------------------------------------------------------
def reference(x, p):
    def lin(t, w, b):
        return t @ w.T + b

    q = lin(x, p["wq"], p["bq"])
    k = lin(x, p["wk"], p["bk"])
    v = lin(x, p["wv"], p["bv"])

    Bx, Sx, _ = x.shape

    def split(t):
        return t.reshape(Bx, Sx, H, HD).transpose(0, 2, 1, 3)

    qh, kh, vh = split(q), split(k), split(v)
    s = jnp.einsum("bhqe,bhke->bhqk", qh, kh) / math.sqrt(HD)
    a = jax.nn.softmax(s, axis=-1)
    ctx = jnp.einsum("bhqk,bhke->bhqe", a, vh).transpose(0, 2, 1, 3).reshape(Bx, Sx, D)
    attn = lin(ctx, p["wo"], p["bo"])
    h1 = _layer_norm(x + attn, p["ln1_g"], p["ln1_b"])
    ff = jnp.maximum(lin(h1, p["w1"], p["b1"]), 0.0)
    ff = lin(ff, p["w2"], p["b2"])
    return _layer_norm(h1 + ff, p["ln2_g"], p["ln2_b"])


if __name__ == "__main__":
    key = jax.random.PRNGKey(0)
    kx, kp = jax.random.split(key)
    x = jax.random.normal(kx, (B, S, D), jnp.float32)
    params = init_params(kp)
    wblob, bblob = pack_params(params)

    out = transformer_encoder_layer(x, wblob, bblob)
    out = jax.block_until_ready(out)

    assert out.shape == (B, S, D)
    assert bool(jnp.all(jnp.isfinite(out)))

    # Tightened vs. previous version (exact softmax normalization; only bf16 matmul
    # rounding separates the kernel from the full-f32 reference).
    ref = reference(x, params)
    assert bool(jnp.allclose(out, ref, atol=5e-2, rtol=5e-2))

    print("KERNEL_OK")
</pallas_src>

<mosaic_0001>
module attributes {stable_mosaic.version = 11 : i64} {
  func.func @encoder_layer_kernel(%arg0: i32, %arg1: memref<16x32xf32, #tpu.memory_space<vmem>>, %arg2: memref<224x128xbf16, #tpu.memory_space<vmem>>, %arg3: memref<8x128xf32, #tpu.memory_space<vmem>>, %arg4: memref<16x32xf32, #tpu.memory_space<vmem>>) attributes {dimension_semantics = [#tpu.dimension_semantics<arbitrary>], iteration_bounds = array<i64: 1>, scalar_prefetch = 0 : i64, scratch_operands = 0 : i64, tpu.core_type = #tpu.core_type<tc>, window_params = [{pipeline_mode = #tpu.pipeline_mode<synchronous>, transform_indices = @transform_0, window_bounds = array<i64: 16, 32>}, {pipeline_mode = #tpu.pipeline_mode<synchronous>, transform_indices = @transform_1, window_bounds = array<i64: 224, 128>}, {pipeline_mode = #tpu.pipeline_mode<synchronous>, transform_indices = @transform_2, window_bounds = array<i64: 8, 128>}, {pipeline_mode = #tpu.pipeline_mode<synchronous>, transform_indices = @transform_3, window_bounds = array<i64: 16, 32>}]} {
    %c0 = arith.constant 0 : index
    %c0_0 = arith.constant 0 : index
    %0 = vector.load %arg1[%c0, %c0_0] : memref<16x32xf32, #tpu.memory_space<vmem>>, vector<16x32xf32>
    %1 = arith.truncf %0 : vector<16x32xf32> to vector<16x32xbf16>
    %c0_1 = arith.constant 0 : index
    %c0_2 = arith.constant 0 : index
    %2 = vector.load %arg3[%c0_1, %c0_2] : memref<8x128xf32, #tpu.memory_space<vmem>>, vector<1x96xf32>
    %c1 = arith.constant 1 : index
    %c0_3 = arith.constant 0 : index
    %3 = vector.load %arg3[%c1, %c0_3] : memref<8x128xf32, #tpu.memory_space<vmem>>, vector<1x32xf32>
    %c2 = arith.constant 2 : index
    %c0_4 = arith.constant 0 : index
    %4 = vector.load %arg3[%c2, %c0_4] : memref<8x128xf32, #tpu.memory_space<vmem>>, vector<1x128xf32>
    %c3 = arith.constant 3 : index
    %c0_5 = arith.constant 0 : index
    %5 = vector.load %arg3[%c3, %c0_5] : memref<8x128xf32, #tpu.memory_space<vmem>>, vector<1x32xf32>
    %c4 = arith.constant 4 : index
    %c0_6 = arith.constant 0 : index
    %6 = vector.load %arg3[%c4, %c0_6] : memref<8x128xf32, #tpu.memory_space<vmem>>, vector<1x32xf32>
    %c5 = arith.constant 5 : index
    %c0_7 = arith.constant 0 : index
    %7 = vector.load %arg3[%c5, %c0_7] : memref<8x128xf32, #tpu.memory_space<vmem>>, vector<1x32xf32>
    %c6 = arith.constant 6 : index
    %c0_8 = arith.constant 0 : index
    %8 = vector.load %arg3[%c6, %c0_8] : memref<8x128xf32, #tpu.memory_space<vmem>>, vector<1x32xf32>
    %c7 = arith.constant 7 : index
    %c0_9 = arith.constant 0 : index
    %9 = vector.load %arg3[%c7, %c0_9] : memref<8x128xf32, #tpu.memory_space<vmem>>, vector<1x32xf32>
    %c0_10 = arith.constant 0 : index
    %c0_11 = arith.constant 0 : index
    %10 = vector.load %arg2[%c0_10, %c0_11] : memref<224x128xbf16, #tpu.memory_space<vmem>>, vector<32x96xbf16>
    %cst = arith.constant dense<0.000000e+00> : vector<16x96xf32>
    %11 = tpu.matmul %1, %10, %cst {dimension_numbers = #tpu.dot_dimension_numbers<[1], [0], [0], [1], [0, 0, 1, 1], [], []>} : vector<16x32xbf16>, vector<32x96xbf16>, vector<16x96xf32> -> vector<16x96xf32>
    %12 = vector.broadcast %2 : vector<1x96xf32> to vector<16x96xf32>
    %13 = arith.addf %11, %12 : vector<16x96xf32>
    %14 = vector.extract_strided_slice %13 {offsets = [0, 0], sizes = [8, 8], strides = [1, 1]} : vector<16x96xf32> to vector<8x8xf32>
    %15 = arith.truncf %14 : vector<8x8xf32> to vector<8x8xbf16>
    %16 = vector.extract_strided_slice %13 {offsets = [0, 32], sizes = [8, 8], strides = [1, 1]} : vector<16x96xf32> to vector<8x8xf32>
    %17 = arith.truncf %16 : vector<8x8xf32> to vector<8x8xbf16>
    %18 = vector.extract_strided_slice %13 {offsets = [0, 64], sizes = [8, 8], strides = [1, 1]} : vector<16x96xf32> to vector<8x8xf32>
    %19 = arith.truncf %18 : vector<8x8xf32> to vector<8x8xbf16>
    "tpu.trace_start"() <{level = 10 : i32, message = "qe,ke->qk"}> : () -> ()
    %cst_12 = arith.constant dense<0.000000e+00> : vector<8x8xf32>
    %20 = tpu.matmul %15, %17, %cst_12 {dimension_numbers = #tpu.dot_dimension_numbers<[1], [1], [0], [0], [0, 0, 1, 0], [], []>} : vector<8x8xbf16>, vector<8x8xbf16>, vector<8x8xf32> -> vector<8x8xf32>
    "tpu.trace_stop"() : () -> ()
    %cst_13 = arith.constant dense<0xFF800000> : vector<8xf32>
    %21 = vector.multi_reduction <maximumf>, %20, %cst_13 [1] : vector<8x8xf32> to vector<8xf32>
    %22 = vector.shape_cast %21 : vector<8xf32> to vector<8x1xf32>
    %23 = vector.broadcast %22 : vector<8x1xf32> to vector<8x8xf32>
    %24 = arith.subf %20, %23 : vector<8x8xf32>
    %25 = math.exp %24 : vector<8x8xf32>
    %cst_14 = arith.constant dense<0.000000e+00> : vector<8xf32>
    %26 = vector.multi_reduction <add>, %25, %cst_14 [1] : vector<8x8xf32> to vector<8xf32>
    %27 = vector.shape_cast %26 : vector<8xf32> to vector<8x1xf32>
    %28 = vector.broadcast %27 : vector<8x1xf32> to vector<8x8xf32>
    %29 = arith.divf %25, %28 : vector<8x8xf32>
    %30 = arith.truncf %29 : vector<8x8xf32> to vector<8x8xbf16>
    %cst_15 = arith.constant dense<0.000000e+00> : vector<8x8xf32>
    %31 = tpu.matmul %30, %19, %cst_15 {dimension_numbers = #tpu.dot_dimension_numbers<[1], [0], [0], [1], [0, 0, 1, 1], [], []>} : vector<8x8xbf16>, vector<8x8xbf16>, vector<8x8xf32> -> vector<8x8xf32>
    %32 = vector.extract_strided_slice %13 {offsets = [0, 8], sizes = [8, 8], strides = [1, 1]} : vector<16x96xf32> to vector<8x8xf32>
    %33 = arith.truncf %32 : vector<8x8xf32> to vector<8x8xbf16>
    %34 = vector.extract_strided_slice %13 {offsets = [0, 40], sizes = [8, 8], strides = [1, 1]} : vector<16x96xf32> to vector<8x8xf32>
    %35 = arith.truncf %34 : vector<8x8xf32> to vector<8x8xbf16>
    %36 = vector.extract_strided_slice %13 {offsets = [0, 72], sizes = [8, 8], strides = [1, 1]} : vector<16x96xf32> to vector<8x8xf32>
    %37 = arith.truncf %36 : vector<8x8xf32> to vector<8x8xbf16>
    "tpu.trace_start"() <{level = 10 : i32, message = "qe,ke->qk"}> : () -> ()
    %cst_16 = arith.constant dense<0.000000e+00> : vector<8x8xf32>
    %38 = tpu.matmul %33, %35, %cst_16 {dimension_numbers = #tpu.dot_dimension_numbers<[1], [1], [0], [0], [0, 0, 1, 0], [], []>} : vector<8x8xbf16>, vector<8x8xbf16>, vector<8x8xf32> -> vector<8x8xf32>
    "tpu.trace_stop"() : () -> ()
    %cst_17 = arith.constant dense<0xFF800000> : vector<8xf32>
    %39 = vector.multi_reduction <maximumf>, %38, %cst_17 [1] : vector<8x8xf32> to vector<8xf32>
    %40 = vector.shape_cast %39 : vector<8xf32> to vector<8x1xf32>
    %41 = vector.broadcast %40 : vector<8x1xf32> to vector<8x8xf32>
    %42 = arith.subf %38, %41 : vector<8x8xf32>
    %43 = math.exp %42 : vector<8x8xf32>
    %cst_18 = arith.constant dense<0.000000e+00> : vector<8xf32>
    %44 = vector.multi_reduction <add>, %43, %cst_18 [1] : vector<8x8xf32> to vector<8xf32>
    %45 = vector.shape_cast %44 : vector<8xf32> to vector<8x1xf32>
    %46 = vector.broadcast %45 : vector<8x1xf32> to vector<8x8xf32>
    %47 = arith.divf %43, %46 : vector<8x8xf32>
    %48 = arith.truncf %47 : vector<8x8xf32> to vector<8x8xbf16>
    %cst_19 = arith.constant dense<0.000000e+00> : vector<8x8xf32>
    %49 = tpu.matmul %48, %37, %cst_19 {dimension_numbers = #tpu.dot_dimension_numbers<[1], [0], [0], [1], [0, 0, 1, 1], [], []>} : vector<8x8xbf16>, vector<8x8xbf16>, vector<8x8xf32> -> vector<8x8xf32>
    %50 = vector.extract_strided_slice %13 {offsets = [0, 16], sizes = [8, 8], strides = [1, 1]} : vector<16x96xf32> to vector<8x8xf32>
    %51 = arith.truncf %50 : vector<8x8xf32> to vector<8x8xbf16>
    %52 = vector.extract_strided_slice %13 {offsets = [0, 48], sizes = [8, 8], strides = [1, 1]} : vector<16x96xf32> to vector<8x8xf32>
    %53 = arith.truncf %52 : vector<8x8xf32> to vector<8x8xbf16>
    %54 = vector.extract_strided_slice %13 {offsets = [0, 80], sizes = [8, 8], strides = [1, 1]} : vector<16x96xf32> to vector<8x8xf32>
    %55 = arith.truncf %54 : vector<8x8xf32> to vector<8x8xbf16>
    "tpu.trace_start"() <{level = 10 : i32, message = "qe,ke->qk"}> : () -> ()
    %cst_20 = arith.constant dense<0.000000e+00> : vector<8x8xf32>
    %56 = tpu.matmul %51, %53, %cst_20 {dimension_numbers = #tpu.dot_dimension_numbers<[1], [1], [0], [0], [0, 0, 1, 0], [], []>} : vector<8x8xbf16>, vector<8x8xbf16>, vector<8x8xf32> -> vector<8x8xf32>
    "tpu.trace_stop"() : () -> ()
    %cst_21 = arith.constant dense<0xFF800000> : vector<8xf32>
    %57 = vector.multi_reduction <maximumf>, %56, %cst_21 [1] : vector<8x8xf32> to vector<8xf32>
    %58 = vector.shape_cast %57 : vector<8xf32> to vector<8x1xf32>
    %59 = vector.broadcast %58 : vector<8x1xf32> to vector<8x8xf32>
    %60 = arith.subf %56, %59 : vector<8x8xf32>
    %61 = math.exp %60 : vector<8x8xf32>
    %cst_22 = arith.constant dense<0.000000e+00> : vector<8xf32>
    %62 = vector.multi_reduction <add>, %61, %cst_22 [1] : vector<8x8xf32> to vector<8xf32>
    %63 = vector.shape_cast %62 : vector<8xf32> to vector<8x1xf32>
    %64 = vector.broadcast %63 : vector<8x1xf32> to vector<8x8xf32>
    %65 = arith.divf %61, %64 : vector<8x8xf32>
    %66 = arith.truncf %65 : vector<8x8xf32> to vector<8x8xbf16>
    %cst_23 = arith.constant dense<0.000000e+00> : vector<8x8xf32>
    %67 = tpu.matmul %66, %55, %cst_23 {dimension_numbers = #tpu.dot_dimension_numbers<[1], [0], [0], [1], [0, 0, 1, 1], [], []>} : vector<8x8xbf16>, vector<8x8xbf16>, vector<8x8xf32> -> vector<8x8xf32>
    %68 = vector.extract_strided_slice %13 {offsets = [0, 24], sizes = [8, 8], strides = [1, 1]} : vector<16x96xf32> to vector<8x8xf32>
    %69 = arith.truncf %68 : vector<8x8xf32> to vector<8x8xbf16>
    %70 = vector.extract_strided_slice %13 {offsets = [0, 56], sizes = [8, 8], strides = [1, 1]} : vector<16x96xf32> to vector<8x8xf32>
    %71 = arith.truncf %70 : vector<8x8xf32> to vector<8x8xbf16>
    %72 = vector.extract_strided_slice %13 {offsets = [0, 88], sizes = [8, 8], strides = [1, 1]} : vector<16x96xf32> to vector<8x8xf32>
    %73 = arith.truncf %72 : vector<8x8xf32> to vector<8x8xbf16>
    "tpu.trace_start"() <{level = 10 : i32, message = "qe,ke->qk"}> : () -> ()
    %cst_24 = arith.constant dense<0.000000e+00> : vector<8x8xf32>
    %74 = tpu.matmul %69, %71, %cst_24 {dimension_numbers = #tpu.dot_dimension_numbers<[1], [1], [0], [0], [0, 0, 1, 0], [], []>} : vector<8x8xbf16>, vector<8x8xbf16>, vector<8x8xf32> -> vector<8x8xf32>
    "tpu.trace_stop"() : () -> ()
    %cst_25 = arith.constant dense<0xFF800000> : vector<8xf32>
    %75 = vector.multi_reduction <maximumf>, %74, %cst_25 [1] : vector<8x8xf32> to vector<8xf32>
    %76 = vector.shape_cast %75 : vector<8xf32> to vector<8x1xf32>
    %77 = vector.broadcast %76 : vector<8x1xf32> to vector<8x8xf32>
    %78 = arith.subf %74, %77 : vector<8x8xf32>
    %79 = math.exp %78 : vector<8x8xf32>
    %cst_26 = arith.constant dense<0.000000e+00> : vector<8xf32>
    %80 = vector.multi_reduction <add>, %79, %cst_26 [1] : vector<8x8xf32> to vector<8xf32>
    %81 = vector.shape_cast %80 : vector<8xf32> to vector<8x1xf32>
    %82 = vector.broadcast %81 : vector<8x1xf32> to vector<8x8xf32>
    %83 = arith.divf %79, %82 : vector<8x8xf32>
    %84 = arith.truncf %83 : vector<8x8xf32> to vector<8x8xbf16>
    %cst_27 = arith.constant dense<0.000000e+00> : vector<8x8xf32>
    %85 = tpu.matmul %84, %73, %cst_27 {dimension_numbers = #tpu.dot_dimension_numbers<[1], [0], [0], [1], [0, 0, 1, 1], [], []>} : vector<8x8xbf16>, vector<8x8xbf16>, vector<8x8xf32> -> vector<8x8xf32>
    %86 = tpu.concatenate %31, %49, %67, %85 in 1 : vector<8x8xf32>, vector<8x8xf32>, vector<8x8xf32>, vector<8x8xf32> -> vector<8x32xf32>
    %87 = vector.extract_strided_slice %13 {offsets = [8, 0], sizes = [8, 8], strides = [1, 1]} : vector<16x96xf32> to vector<8x8xf32>
    %88 = arith.truncf %87 : vector<8x8xf32> to vector<8x8xbf16>
    %89 = vector.extract_strided_slice %13 {offsets = [8, 32], sizes = [8, 8], strides = [1, 1]} : vector<16x96xf32> to vector<8x8xf32>
    %90 = arith.truncf %89 : vector<8x8xf32> to vector<8x8xbf16>
    %91 = vector.extract_strided_slice %13 {offsets = [8, 64], sizes = [8, 8], strides = [1, 1]} : vector<16x96xf32> to vector<8x8xf32>
    %92 = arith.truncf %91 : vector<8x8xf32> to vector<8x8xbf16>
    "tpu.trace_start"() <{level = 10 : i32, message = "qe,ke->qk"}> : () -> ()
    %cst_28 = arith.constant dense<0.000000e+00> : vector<8x8xf32>
    %93 = tpu.matmul %88, %90, %cst_28 {dimension_numbers = #tpu.dot_dimension_numbers<[1], [1], [0], [0], [0, 0, 1, 0], [], []>} : vector<8x8xbf16>, vector<8x8xbf16>, vector<8x8xf32> -> vector<8x8xf32>
    "tpu.trace_stop"() : () -> ()
    %cst_29 = arith.constant dense<0xFF800000> : vector<8xf32>
    %94 = vector.multi_reduction <maximumf>, %93, %cst_29 [1] : vector<8x8xf32> to vector<8xf32>
    %95 = vector.shape_cast %94 : vector<8xf32> to vector<8x1xf32>
    %96 = vector.broadcast %95 : vector<8x1xf32> to vector<8x8xf32>
    %97 = arith.subf %93, %96 : vector<8x8xf32>
    %98 = math.exp %97 : vector<8x8xf32>
    %cst_30 = arith.constant dense<0.000000e+00> : vector<8xf32>
    %99 = vector.multi_reduction <add>, %98, %cst_30 [1] : vector<8x8xf32> to vector<8xf32>
    %100 = vector.shape_cast %99 : vector<8xf32> to vector<8x1xf32>
    %101 = vector.broadcast %100 : vector<8x1xf32> to vector<8x8xf32>
    %102 = arith.divf %98, %101 : vector<8x8xf32>
    %103 = arith.truncf %102 : vector<8x8xf32> to vector<8x8xbf16>
    %cst_31 = arith.constant dense<0.000000e+00> : vector<8x8xf32>
    %104 = tpu.matmul %103, %92, %cst_31 {dimension_numbers = #tpu.dot_dimension_numbers<[1], [0], [0], [1], [0, 0, 1, 1], [], []>} : vector<8x8xbf16>, vector<8x8xbf16>, vector<8x8xf32> -> vector<8x8xf32>
    %105 = vector.extract_strided_slice %13 {offsets = [8, 8], sizes = [8, 8], strides = [1, 1]} : vector<16x96xf32> to vector<8x8xf32>
    %106 = arith.truncf %105 : vector<8x8xf32> to vector<8x8xbf16>
    %107 = vector.extract_strided_slice %13 {offsets = [8, 40], sizes = [8, 8], strides = [1, 1]} : vector<16x96xf32> to vector<8x8xf32>
    %108 = arith.truncf %107 : vector<8x8xf32> to vector<8x8xbf16>
    %109 = vector.extract_strided_slice %13 {offsets = [8, 72], sizes = [8, 8], strides = [1, 1]} : vector<16x96xf32> to vector<8x8xf32>
    %110 = arith.truncf %109 : vector<8x8xf32> to vector<8x8xbf16>
    "tpu.trace_start"() <{level = 10 : i32, message = "qe,ke->qk"}> : () -> ()
    %cst_32 = arith.constant dense<0.000000e+00> : vector<8x8xf32>
    %111 = tpu.matmul %106, %108, %cst_32 {dimension_numbers = #tpu.dot_dimension_numbers<[1], [1], [0], [0], [0, 0, 1, 0], [], []>} : vector<8x8xbf16>, vector<8x8xbf16>, vector<8x8xf32> -> vector<8x8xf32>
    "tpu.trace_stop"() : () -> ()
    %cst_33 = arith.constant dense<0xFF800000> : vector<8xf32>
    %112 = vector.multi_reduction <maximumf>, %111, %cst_33 [1] : vector<8x8xf32> to vector<8xf32>
    %113 = vector.shape_cast %112 : vector<8xf32> to vector<8x1xf32>
    %114 = vector.broadcast %113 : vector<8x1xf32> to vector<8x8xf32>
    %115 = arith.subf %111, %114 : vector<8x8xf32>
    %116 = math.exp %115 : vector<8x8xf32>
    %cst_34 = arith.constant dense<0.000000e+00> : vector<8xf32>
    %117 = vector.multi_reduction <add>, %116, %cst_34 [1] : vector<8x8xf32> to vector<8xf32>
    %118 = vector.shape_cast %117 : vector<8xf32> to vector<8x1xf32>
    %119 = vector.broadcast %118 : vector<8x1xf32> to vector<8x8xf32>
    %120 = arith.divf %116, %119 : vector<8x8xf32>
    %121 = arith.truncf %120 : vector<8x8xf32> to vector<8x8xbf16>
    %cst_35 = arith.constant dense<0.000000e+00> : vector<8x8xf32>
    %122 = tpu.matmul %121, %110, %cst_35 {dimension_numbers = #tpu.dot_dimension_numbers<[1], [0], [0], [1], [0, 0, 1, 1], [], []>} : vector<8x8xbf16>, vector<8x8xbf16>, vector<8x8xf32> -> vector<8x8xf32>
    %123 = vector.extract_strided_slice %13 {offsets = [8, 16], sizes = [8, 8], strides = [1, 1]} : vector<16x96xf32> to vector<8x8xf32>
    %124 = arith.truncf %123 : vector<8x8xf32> to vector<8x8xbf16>
    %125 = vector.extract_strided_slice %13 {offsets = [8, 48], sizes = [8, 8], strides = [1, 1]} : vector<16x96xf32> to vector<8x8xf32>
    %126 = arith.truncf %125 : vector<8x8xf32> to vector<8x8xbf16>
    %127 = vector.extract_strided_slice %13 {offsets = [8, 80], sizes = [8, 8], strides = [1, 1]} : vector<16x96xf32> to vector<8x8xf32>
    %128 = arith.truncf %127 : vector<8x8xf32> to vector<8x8xbf16>
    "tpu.trace_start"() <{level = 10 : i32, message = "qe,ke->qk"}> : () -> ()
    %cst_36 = arith.constant dense<0.000000e+00> : vector<8x8xf32>
    %129 = tpu.matmul %124, %126, %cst_36 {dimension_numbers = #tpu.dot_dimension_numbers<[1], [1], [0], [0], [0, 0, 1, 0], [], []>} : vector<8x8xbf16>, vector<8x8xbf16>, vector<8x8xf32> -> vector<8x8xf32>
    "tpu.trace_stop"() : () -> ()
    %cst_37 = arith.constant dense<0xFF800000> : vector<8xf32>
    %130 = vector.multi_reduction <maximumf>, %129, %cst_37 [1] : vector<8x8xf32> to vector<8xf32>
    %131 = vector.shape_cast %130 : vector<8xf32> to vector<8x1xf32>
    %132 = vector.broadcast %131 : vector<8x1xf32> to vector<8x8xf32>
    %133 = arith.subf %129, %132 : vector<8x8xf32>
    %134 = math.exp %133 : vector<8x8xf32>
    %cst_38 = arith.constant dense<0.000000e+00> : vector<8xf32>
    %135 = vector.multi_reduction <add>, %134, %cst_38 [1] : vector<8x8xf32> to vector<8xf32>
    %136 = vector.shape_cast %135 : vector<8xf32> to vector<8x1xf32>
    %137 = vector.broadcast %136 : vector<8x1xf32> to vector<8x8xf32>
    %138 = arith.divf %134, %137 : vector<8x8xf32>
    %139 = arith.truncf %138 : vector<8x8xf32> to vector<8x8xbf16>
    %cst_39 = arith.constant dense<0.000000e+00> : vector<8x8xf32>
    %140 = tpu.matmul %139, %128, %cst_39 {dimension_numbers = #tpu.dot_dimension_numbers<[1], [0], [0], [1], [0, 0, 1, 1], [], []>} : vector<8x8xbf16>, vector<8x8xbf16>, vector<8x8xf32> -> vector<8x8xf32>
    %141 = vector.extract_strided_slice %13 {offsets = [8, 24], sizes = [8, 8], strides = [1, 1]} : vector<16x96xf32> to vector<8x8xf32>
    %142 = arith.truncf %141 : vector<8x8xf32> to vector<8x8xbf16>
    %143 = vector.extract_strided_slice %13 {offsets = [8, 56], sizes = [8, 8], strides = [1, 1]} : vector<16x96xf32> to vector<8x8xf32>
    %144 = arith.truncf %143 : vector<8x8xf32> to vector<8x8xbf16>
    %145 = vector.extract_strided_slice %13 {offsets = [8, 88], sizes = [8, 8], strides = [1, 1]} : vector<16x96xf32> to vector<8x8xf32>
    %146 = arith.truncf %145 : vector<8x8xf32> to vector<8x8xbf16>
    "tpu.trace_start"() <{level = 10 : i32, message = "qe,ke->qk"}> : () -> ()
    %cst_40 = arith.constant dense<0.000000e+00> : vector<8x8xf32>
    %147 = tpu.matmul %142, %144, %cst_40 {dimension_numbers = #tpu.dot_dimension_numbers<[1], [1], [0], [0], [0, 0, 1, 0], [], []>} : vector<8x8xbf16>, vector<8x8xbf16>, vector<8x8xf32> -> vector<8x8xf32>
    "tpu.trace_stop"() : () -> ()
    %cst_41 = arith.constant dense<0xFF800000> : vector<8xf32>
    %148 = vector.multi_reduction <maximumf>, %147, %cst_41 [1] : vector<8x8xf32> to vector<8xf32>
    %149 = vector.shape_cast %148 : vector<8xf32> to vector<8x1xf32>
    %150 = vector.broadcast %149 : vector<8x1xf32> to vector<8x8xf32>
    %151 = arith.subf %147, %150 : vector<8x8xf32>
    %152 = math.exp %151 : vector<8x8xf32>
    %cst_42 = arith.constant dense<0.000000e+00> : vector<8xf32>
    %153 = vector.multi_reduction <add>, %152, %cst_42 [1] : vector<8x8xf32> to vector<8xf32>
    %154 = vector.shape_cast %153 : vector<8xf32> to vector<8x1xf32>
    %155 = vector.broadcast %154 : vector<8x1xf32> to vector<8x8xf32>
    %156 = arith.divf %152, %155 : vector<8x8xf32>
    %157 = arith.truncf %156 : vector<8x8xf32> to vector<8x8xbf16>
    %cst_43 = arith.constant dense<0.000000e+00> : vector<8x8xf32>
    %158 = tpu.matmul %157, %146, %cst_43 {dimension_numbers = #tpu.dot_dimension_numbers<[1], [0], [0], [1], [0, 0, 1, 1], [], []>} : vector<8x8xbf16>, vector<8x8xbf16>, vector<8x8xf32> -> vector<8x8xf32>
    %159 = tpu.concatenate %104, %122, %140, %158 in 1 : vector<8x8xf32>, vector<8x8xf32>, vector<8x8xf32>, vector<8x8xf32> -> vector<8x32xf32>
    %160 = tpu.concatenate %86, %159 in 0 : vector<8x32xf32>, vector<8x32xf32> -> vector<16x32xf32>
    %161 = arith.truncf %160 : vector<16x32xf32> to vector<16x32xbf16>
    %c32 = arith.constant 32 : index
    %c0_44 = arith.constant 0 : index
    %162 = vector.load %arg2[%c32, %c0_44] : memref<224x128xbf16, #tpu.memory_space<vmem>>, vector<32x32xbf16>
    %cst_45 = arith.constant dense<0.000000e+00> : vector<16x32xf32>
    %163 = tpu.matmul %161, %162, %cst_45 {dimension_numbers = #tpu.dot_dimension_numbers<[1], [0], [0], [1], [0, 0, 1, 1], [], []>} : vector<16x32xbf16>, vector<32x32xbf16>, vector<16x32xf32> -> vector<16x32xf32>
    %164 = vector.broadcast %3 : vector<1x32xf32> to vector<16x32xf32>
    %165 = arith.addf %163, %164 : vector<16x32xf32>
    %166 = arith.addf %0, %165 : vector<16x32xf32>
    %cst_46 = arith.constant dense<0.000000e+00> : vector<16xf32>
    %167 = vector.multi_reduction <add>, %166, %cst_46 [1] : vector<16x32xf32> to vector<16xf32>
    %168 = vector.shape_cast %167 : vector<16xf32> to vector<16x1xf32>
    %cst_47 = arith.constant 3.200000e+01 : f32
    %169 = vector.broadcast %cst_47 : f32 to vector<16x1xf32>
    %170 = arith.divf %168, %169 : vector<16x1xf32>
    %171 = vector.broadcast %170 : vector<16x1xf32> to vector<16x32xf32>
    %172 = arith.subf %166, %171 : vector<16x32xf32>
    %173 = arith.mulf %172, %172 : vector<16x32xf32>
    %cst_48 = arith.constant dense<0.000000e+00> : vector<16xf32>
    %174 = vector.multi_reduction <add>, %173, %cst_48 [1] : vector<16x32xf32> to vector<16xf32>
    %175 = vector.shape_cast %174 : vector<16xf32> to vector<16x1xf32>
    %cst_49 = arith.constant 3.200000e+01 : f32
    %176 = vector.broadcast %cst_49 : f32 to vector<16x1xf32>
    %177 = arith.divf %175, %176 : vector<16x1xf32>
    %cst_50 = arith.constant 9.99999974E-6 : f32
    %178 = vector.broadcast %cst_50 : f32 to vector<16x1xf32>
    %179 = arith.addf %177, %178 : vector<16x1xf32>
    %180 = math.rsqrt %179 : vector<16x1xf32>
    %181 = vector.broadcast %170 : vector<16x1xf32> to vector<16x32xf32>
    %182 = arith.subf %166, %181 : vector<16x32xf32>
    %183 = vector.broadcast %180 : vector<16x1xf32> to vector<16x32xf32>
    %184 = arith.mulf %182, %183 : vector<16x32xf32>
    %185 = vector.broadcast %6 : vector<1x32xf32> to vector<16x32xf32>
    %186 = arith.mulf %184, %185 : vector<16x32xf32>
    %187 = vector.broadcast %7 : vector<1x32xf32> to vector<16x32xf32>
    %188 = arith.addf %186, %187 : vector<16x32xf32>
    %189 = arith.truncf %188 : vector<16x32xf32> to vector<16x32xbf16>
    %c64 = arith.constant 64 : index
    %c0_51 = arith.constant 0 : index
    %190 = vector.load %arg2[%c64, %c0_51] : memref<224x128xbf16, #tpu.memory_space<vmem>>, vector<32x128xbf16>
    %cst_52 = arith.constant dense<0.000000e+00> : vector<16x128xf32>
    %191 = tpu.matmul %189, %190, %cst_52 {dimension_numbers = #tpu.dot_dimension_numbers<[1], [0], [0], [1], [0, 0, 1, 1], [], []>} : vector<16x32xbf16>, vector<32x128xbf16>, vector<16x128xf32> -> vector<16x128xf32>
    %192 = vector.broadcast %4 : vector<1x128xf32> to vector<16x128xf32>
    %193 = arith.addf %191, %192 : vector<16x128xf32>
    %cst_53 = arith.constant 0.000000e+00 : f32
    %194 = vector.broadcast %cst_53 : f32 to vector<16x128xf32>
    %195 = arith.maximumf %193, %194 : vector<16x128xf32>
    %196 = arith.truncf %195 : vector<16x128xf32> to vector<16x128xbf16>
    %c96 = arith.constant 96 : index
    %c0_54 = arith.constant 0 : index
    %197 = vector.load %arg2[%c96, %c0_54] : memref<224x128xbf16, #tpu.memory_space<vmem>>, vector<128x32xbf16>
    %cst_55 = arith.constant dense<0.000000e+00> : vector<16x32xf32>
    %198 = tpu.matmul %196, %197, %cst_55 {dimension_numbers = #tpu.dot_dimension_numbers<[1], [0], [0], [1], [0, 0, 1, 1], [], []>} : vector<16x128xbf16>, vector<128x32xbf16>, vector<16x32xf32> -> vector<16x32xf32>
    %199 = vector.broadcast %5 : vector<1x32xf32> to vector<16x32xf32>
    %200 = arith.addf %198, %199 : vector<16x32xf32>
    %201 = arith.addf %188, %200 : vector<16x32xf32>
    %cst_56 = arith.constant dense<0.000000e+00> : vector<16xf32>
    %202 = vector.multi_reduction <add>, %201, %cst_56 [1] : vector<16x32xf32> to vector<16xf32>
    %203 = vector.shape_cast %202 : vector<16xf32> to vector<16x1xf32>
    %cst_57 = arith.constant 3.200000e+01 : f32
    %204 = vector.broadcast %cst_57 : f32 to vector<16x1xf32>
    %205 = arith.divf %203, %204 : vector<16x1xf32>
    %206 = vector.broadcast %205 : vector<16x1xf32> to vector<16x32xf32>
    %207 = arith.subf %201, %206 : vector<16x32xf32>
    %208 = arith.mulf %207, %207 : vector<16x32xf32>
    %cst_58 = arith.constant dense<0.000000e+00> : vector<16xf32>
    %209 = vector.multi_reduction <add>, %208, %cst_58 [1] : vector<16x32xf32> to vector<16xf32>
    %210 = vector.shape_cast %209 : vector<16xf32> to vector<16x1xf32>
    %cst_59 = arith.constant 3.200000e+01 : f32
    %211 = vector.broadcast %cst_59 : f32 to vector<16x1xf32>
    %212 = arith.divf %210, %211 : vector<16x1xf32>
    %cst_60 = arith.constant 9.99999974E-6 : f32
    %213 = vector.broadcast %cst_60 : f32 to vector<16x1xf32>
    %214 = arith.addf %212, %213 : vector<16x1xf32>
    %215 = math.rsqrt %214 : vector<16x1xf32>
    %216 = vector.broadcast %205 : vector<16x1xf32> to vector<16x32xf32>
    %217 = arith.subf %201, %216 : vector<16x32xf32>
    %218 = vector.broadcast %215 : vector<16x1xf32> to vector<16x32xf32>
    %219 = arith.mulf %217, %218 : vector<16x32xf32>
    %220 = vector.broadcast %8 : vector<1x32xf32> to vector<16x32xf32>
    %221 = arith.mulf %219, %220 : vector<16x32xf32>
    %222 = vector.broadcast %9 : vector<1x32xf32> to vector<16x32xf32>
    %223 = arith.addf %221, %222 : vector<16x32xf32>
    %c0_61 = arith.constant 0 : index
    %c0_62 = arith.constant 0 : index
    %224 = vector.load %arg4[%c0_61, %c0_62] : memref<16x32xf32, #tpu.memory_space<vmem>>, vector<16x32xf32>
    tpu.vector_store %arg4[%c0_61, %c0_62], %223 {strides = array<i32>} : memref<16x32xf32, #tpu.memory_space<vmem>>, vector<16x32xf32>,
    return
  }
  func.func @transform_0(%arg0: i32) -> (i32, i32) {
    %c0_i32 = arith.constant 0 : i32
    %c0_i32_0 = arith.constant 0 : i32
    %c0_i32_1 = arith.constant 0 : i32
    return %c0_i32, %c0_i32_0 : i32, i32
  }
  func.func @transform_1(%arg0: i32) -> (i32, i32) {
    %c0_i32 = arith.constant 0 : i32
    %c0_i32_0 = arith.constant 0 : i32
    %c0_i32_1 = arith.constant 0 : i32
    return %c0_i32, %c0_i32_0 : i32, i32
  }
  func.func @transform_2(%arg0: i32) -> (i32, i32) {
    %c0_i32 = arith.constant 0 : i32
    %c0_i32_0 = arith.constant 0 : i32
    %c0_i32_1 = arith.constant 0 : i32
    return %c0_i32, %c0_i32_0 : i32, i32
  }
  func.func @transform_3(%arg0: i32) -> (i32, i32) {
    %c0_i32 = arith.constant 0 : i32
    %c0_i32_0 = arith.constant 0 : i32
    %c0_i32_1 = arith.constant 0 : i32
    return %c0_i32, %c0_i32_0 : i32, i32
  }
}

</mosaic_0001>

<llo_original>
// kernel: tpu_custom_call.1
$region0: #{tpu_custom_call.1}
  #allocation0 [shape = 'u32[]', space=smem, size = 0x4, offset = 0x4, fixed_abs, tag = 'smem constant byte address 0x4 - core index']
  #allocation1 [shape = 'u32[144,128]{1,0:T(1,128)}', space=vmem, size = 0x12000, scoped, tag = 'internal scratch']
  %s0 = inlined_call_operand.hbm [shape: f32[16,32], index: 0, kind: input, shape index: {}]
  %s1 = inlined_call_operand.hbm [shape: bf16[224,128], index: 1, kind: input, shape index: {}]
  %s2 = inlined_call_operand.hbm [shape: f32[8,128], index: 2, kind: input, shape index: {}]
  %s3 = inlined_call_operand.hbm [shape: f32[16,32], index: 3, kind: output, shape index: {}]
  %s4 = sld [smem:[#allocation0]]
  $region34: #{tpu_custom_call.1} parent=0
    _
  %s6 = ssub.s32 1, %s4
  %s7 = scalar_select 0, %s6, %s4
  $region1: #{tpu_custom_call.1} parent=0
    #allocation2 [shape = 'u8[8192]{0}', space=vmem, size = 0x2000, scoped, tag = 'input window, operand 0, single buffered']
    #allocation3 [shape = 's32[1]{0}', space=sflag, size = 0x4, scoped, tag = 'scoped memory for tpu_custom_call.1']
    #allocation4 [shape = 's32[1]{0}', space=sflag, size = 0x4, scoped, tag = 'scoped memory for tpu_custom_call.1']
    #allocation5 [shape = 'u8[57344]{0}', space=vmem, size = 0xe000, scoped, tag = 'input window, operand 1, single buffered']
    #allocation6 [shape = 's32[1]{0}', space=sflag, size = 0x4, scoped, tag = 'scoped memory for tpu_custom_call.1']
    #allocation7 [shape = 'u8[4096]{0}', space=vmem, size = 0x1000, scoped, tag = 'input window, operand 2, single buffered']
    #allocation8 [shape = 'u8[8192]{0}', space=vmem, size = 0x2000, scoped, tag = 'output window, operand 0, single buffered']
    %8 = vsyncpa [#allocation3], 0
    %9 = vsyncpa [#allocation6], 0
    %10 = vsyncpa [#allocation4], 0
    // Predicated region
    $region2: #{tpu_custom_call.1} parent=1 // pred_check
      _
    $region3: #{tpu_custom_call.1} parent=1 // pred_check_branch
      %12 = sbr.rel (0) target = $region5
    $region4: #{tpu_custom_call.1} parent=1 // pred_region
      %s14 = ssub.s32 256, 256
      %15 = vsyncadd [#allocation3], %s14
      %s16 = sshll.u32 [#allocation2], 4
      %s17 = int_to_ptr.vmem [resolvable:$true] %s16
      %22 = dma.hbm_to_vmem [thread:$0]  %s0, 256, %s17, [#allocation3], 128, 128, 8
    $region5: #{tpu_custom_call.1} parent=1 // pred_fallthru
      _
    // Predicated region
    $region6: #{tpu_custom_call.1} parent=1 // pred_check
      _
    $region7: #{tpu_custom_call.1} parent=1 // pred_check_branch
      %24 = sbr.rel (0) target = $region9
    $region8: #{tpu_custom_call.1} parent=1 // pred_region
      %s26 = ssub.s32 1792, 1792
      %27 = vsyncadd [#allocation6], %s26
      %s28 = sshll.u32 [#allocation5], 4
      %s29 = int_to_ptr.vmem [resolvable:$true] %s28
      %34 = dma.hbm_to_vmem [thread:$0]  %s1, 1792, %s29, [#allocation6], 64, 64, 4
    $region9: #{tpu_custom_call.1} parent=1 // pred_fallthru
      _
    // Predicated region
    $region10: #{tpu_custom_call.1} parent=1 // pred_check
      _
    $region11: #{tpu_custom_call.1} parent=1 // pred_check_branch
      %36 = sbr.rel (0) target = $region13
    $region12: #{tpu_custom_call.1} parent=1 // pred_region
      %s38 = ssub.s32 128, 128
      %39 = vsyncadd [#allocation6], %s38
      %s41 = sshll.u32 [#allocation7], 4
      %s42 = int_to_ptr.vmem [resolvable:$true] %s41
      %44 = dma.hbm_to_vmem [thread:$0]  %s2, 128, %s42, [#allocation6]
    $region13: #{tpu_custom_call.1} parent=1 // pred_fallthru
      _
    // Predicated region
    $region14: #{tpu_custom_call.1} parent=1 // pred_check
      _
    $region15: #{tpu_custom_call.1} parent=1 // pred_check_branch
      %46 = sbr.rel (0) target = $region17
    $region16: #{tpu_custom_call.1} parent=1 // pred_region
      %47 = dma.done [#allocation3], 256
    $region17: #{tpu_custom_call.1} parent=1 // pred_fallthru
      _
    // Predicated region
    $region18: #{tpu_custom_call.1} parent=1 // pred_check
      _
    $region19: #{tpu_custom_call.1} parent=1 // pred_check_branch
      %49 = sbr.rel (0) target = $region21
    $region20: #{tpu_custom_call.1} parent=1 // pred_region
      %50 = dma.done [#allocation6], 1792
    $region21: #{tpu_custom_call.1} parent=1 // pred_fallthru
      _
    // Predicated region
    $region22: #{tpu_custom_call.1} parent=1 // pred_check
      _
    $region23: #{tpu_custom_call.1} parent=1 // pred_check_branch
      %52 = sbr.rel (0) target = $region25
    $region24: #{tpu_custom_call.1} parent=1 // pred_region
      %53 = dma.done [#allocation6], 128
    $region25: #{tpu_custom_call.1} parent=1 // pred_fallthru
      _
    %v55 = vld [vmem:[#allocation2] sm:$0xff]
    %v56 = vld [vmem:[#allocation2 + $0x8] sm:$0xff]
    %v57 = vpack.c.bf16 %v56, %v55
    %v58 = vld [vmem:[#allocation7] sm:$0x1]
    %v59 = vld [vmem:[#allocation7 + $0x1] sm:$0x1]
    %v60 = vld [vmem:[#allocation7 + $0x2] sm:$0x1]
    %v61 = vld [vmem:[#allocation7 + $0x3] sm:$0x1]
    %v62 = vld [vmem:[#allocation7 + $0x4] sm:$0x1]
    %v63 = vld [vmem:[#allocation7 + $0x5] sm:$0x1]
    %v64 = vld [vmem:[#allocation7 + $0x6] sm:$0x1]
    %v65 = vld [vmem:[#allocation7 + $0x7] sm:$0x1]
    %v66 = vld [vmem:[#allocation5] sm:$0xf]
    %v67 = vld [vmem:[#allocation5 + $0x4] sm:$0xf]
    %v68 = vld [vmem:[#allocation5 + $0x8] sm:$0xf]
    %v69 = vld [vmem:[#allocation5 + $0xc] sm:$0xf]
    %v70 = vlaneseq
    %v71 = vshrl.u32 %v70, 7
    %v72 = vsub.s32 0, %v71
    %v73 = vrot.slane %v58, %v72
    %v78 = vunpack.c.l.b16 %v66
    %v79 = vunpack.c.l.b16 %v67
    %v80 = vunpack.c.l.b16 %v68
    %v81 = vunpack.c.l.b16 %v69
    %v82 = vpack.c.b16 %v79, %v78
    %v83 = vpack.c.b16 %v81, %v80
    %vm86 = vcmask 261120
    %v88 = vsel %vm86, %v57, 0
    %90 = vmatprep.subr.bf16.mxu0 0
    %91 = vmatpush1.bf16.msra.mxu0 0
    %92 = vmatprep.subr.bf16.mxu0 0
    %93 = vmatpush1.bf16.msra.mxu0 0
    %94 = vmatprep.subr.bf16.mxu0 0
    %95 = vmatpush1.bf16.msra.mxu0 0
    %96 = vmatprep.subr.bf16.mxu0 0
    %97 = vmatpush1.bf16.msra.mxu0 0
    %98 = vmatprep.subr.bf16.mxu0 0
    %99 = vmatpush1.bf16.msra.mxu0 0
    %100 = vmatprep.subr.bf16.mxu0 0
    %101 = vmatpush1.bf16.msra.mxu0 0
    %102 = vmatprep.subr.bf16.mxu0 0
    %103 = vmatpush1.bf16.msra.mxu0 %v83
    %104 = vmatprep.subr.bf16.mxu0 0
    %105 = vmatpush1.bf16.msra.mxu0 %v82
    %106 = vmatprep.subr.bf16.mxu0 0
    %107 = vmatpush2.bf16.msra.mxu0 0
    %108 = vmatprep.subr.bf16.mxu0 0
    %109 = vmatpush2.bf16.msra.mxu0 0
    %110 = vmatprep.subr.bf16.mxu0 0
    %111 = vmatpush2.bf16.msra.mxu0 0
    %112 = vmatprep.subr.bf16.mxu0 0
    %113 = vmatpush2.bf16.msra.mxu0 0
    %114 = vmatprep.subr.bf16.mxu0 0
    %115 = vmatpush2.bf16.msra.mxu0 0
    %116 = vmatprep.subr.bf16.mxu0 0
    %117 = vmatpush2.bf16.msra.mxu0 0
    %118 = vmatprep.subr.bf16.mxu0 0
    %119 = vmatpush2.bf16.msra.mxu0 0
    %120 = vmatprep.subr.bf16.mxu0 0
    %121 = vmatpush2.bf16.msra.mxu0 0
    %122 = vmatprep.mubr.bf16.mxu0 0
    %123 = vmatmul.mubr.bf16.gmra.mxu0 %v88
    %v124 = vpop.f32.mrf.mxu0
    %v125 = vadd.f32 %v73, %v124
    %v126 = vpop.f32.mrf.mxu0
    %v127 = vpop.f32.mrf.mxu0
    %v128 = vadd.f32 %v73, %v127
    %v129 = vpop.f32.mrf.mxu0
    %130 = vdwg.mxu0
    %v131 = vpack.c.bf16 %v125, %v125
    %133 = vrot.lane.b32.xlu0 %v131, 96
    %v134 = vpop.permute.xlu0 %133
    %vm135 = vcmask 64512
    %v137 = vsel %vm135, %v131, 0
    %v140 = vsel %vm135, %v134, 0
    %142 = vmatprep.subr.bf16.mxu0 0
    %143 = vmatpush1.bf16.xpose.msra.mxu0 0
    %144 = vmatprep.subr.bf16.mxu0 0
    %145 = vmatpush1.bf16.xpose.msra.mxu0 0
    %146 = vmatprep.subr.bf16.mxu0 0
    %147 = vmatpush1.bf16.xpose.msra.mxu0 0
    %148 = vmatprep.subr.bf16.mxu0 0
    %149 = vmatpush1.bf16.xpose.msra.mxu0 0
    %150 = vmatprep.subr.bf16.mxu0 0
    %151 = vmatpush1.bf16.xpose.msra.mxu0 0
    %152 = vmatprep.subr.bf16.mxu0 0
    %153 = vmatpush1.bf16.xpose.msra.mxu0 0
    %154 = vmatprep.subr.bf16.mxu0 0
    %155 = vmatpush1.bf16.xpose.msra.mxu0 0
    %156 = vmatprep.subr.bf16.mxu0 0
    %157 = vmatpush1.bf16.xpose.msra.mxu0 %v140
    %158 = vmatprep.subr.bf16.mxu0 0
    %159 = vmatpush2.bf16.xpose.msra.mxu0 0
    %160 = vmatprep.subr.bf16.mxu0 0
    %161 = vmatpush2.bf16.xpose.msra.mxu0 0
    %162 = vmatprep.subr.bf16.mxu0 0
    %163 = vmatpush2.bf16.xpose.msra.mxu0 0
    %164 = vmatprep.subr.bf16.mxu0 0
    %165 = vmatpush2.bf16.xpose.msra.mxu0 0
    %166 = vmatprep.subr.bf16.mxu0 0
    %167 = vmatpush2.bf16.xpose.msra.mxu0 0
    %168 = vmatprep.subr.bf16.mxu0 0
    %169 = vmatpush2.bf16.xpose.msra.mxu0 0
    %170 = vmatprep.subr.bf16.mxu0 0
    %171 = vmatpush2.bf16.xpose.msra.mxu0 0
    %172 = vmatprep.subr.bf16.mxu0 0
    %173 = vmatpush2.bf16.xpose.msra.mxu0 0
    %174 = vmatprep.mubr.bf16.mxu0 0
    %175 = vmatmul.mubr.bf16.gmra.mxu0 %v137
    %v176 = vpop.f32.mrf.mxu0
    %v177 = vadd.f32 0.0, %v176
    %v178 = vpop.f32.mrf.mxu0
    %v179 = vpop.f32.mrf.mxu0
    %v180 = vpop.f32.mrf.mxu0
    %181 = vdwg.mxu0
    %v182 = vsel %vm135, %v177, -inf
    %183 = vmax.xlane.f32.xlu0 %v182
    %v184 = vpop.xlane.xlu0 %183
    %v185 = vsub.f32 %v177, %v184
    %v186 = vmul.f32 %v185, 1.442695
    %v187 = vpow.pop %v186
    %v188 = vsel %vm135, %v187, 0.0
    %189 = vadd.xlane.f32.xlu0 %v188
    %v190 = vpop.xlane.xlu0 %189
    %v191 = vrcp.pop %v190
    %v192 = vmul.f32 %v187, %v191
    %v193 = vpack.c.bf16 %v192, %v192
    %194 = vrot.lane.b32.xlu0 %v131, 64
    %v195 = vpop.permute.xlu0 %194
    %v197 = vsel %vm135, %v193, 0
    %vm199 = vcmask 1043456
    %v201 = vsel %vm199, %v195, 0
    %203 = vmatprep.subr.bf16.mxu0 0
    %204 = vmatpush1.bf16.msra.mxu0 0
    %205 = vmatprep.subr.bf16.mxu0 0
    %206 = vmatpush1.bf16.msra.mxu0 0
    %207 = vmatprep.subr.bf16.mxu0 0
    %208 = vmatpush1.bf16.msra.mxu0 0
    %209 = vmatprep.subr.bf16.mxu0 0
    %210 = vmatpush1.bf16.msra.mxu0 0
    %211 = vmatprep.subr.bf16.mxu0 0
    %212 = vmatpush1.bf16.msra.mxu0 0
    %213 = vmatprep.subr.bf16.mxu0 0
    %214 = vmatpush1.bf16.msra.mxu0 0
    %215 = vmatprep.subr.bf16.mxu0 0
    %216 = vmatpush1.bf16.msra.mxu0 0
    %217 = vmatprep.subr.bf16.mxu0 0
    %218 = vmatpush1.bf16.msra.mxu0 %v201
    %219 = vmatprep.subr.bf16.mxu0 0
    %220 = vmatpush2.bf16.msra.mxu0 0
    %221 = vmatprep.subr.bf16.mxu0 0
    %222 = vmatpush2.bf16.msra.mxu0 0
    %223 = vmatprep.subr.bf16.mxu0 0
    %224 = vmatpush2.bf16.msra.mxu0 0
    %225 = vmatprep.subr.bf16.mxu0 0
    %226 = vmatpush2.bf16.msra.mxu0 0
    %227 = vmatprep.subr.bf16.mxu0 0
    %228 = vmatpush2.bf16.msra.mxu0 0
    %229 = vmatprep.subr.bf16.mxu0 0
    %230 = vmatpush2.bf16.msra.mxu0 0
    %231 = vmatprep.subr.bf16.mxu0 0
    %232 = vmatpush2.bf16.msra.mxu0 0
    %233 = vmatprep.subr.bf16.mxu0 0
    %234 = vmatpush2.bf16.msra.mxu0 0
    %235 = vmatprep.mubr.bf16.mxu0 0
    %236 = vmatmul.mubr.bf16.gmra.mxu0 %v197
    %v237 = vpop.f32.mrf.mxu0
    %v238 = vadd.f32 0.0, %v237
    %v239 = vpop.f32.mrf.mxu0
    %v240 = vpop.f32.mrf.mxu0
    %v241 = vpop.f32.mrf.mxu0
    %242 = vdwg.mxu0
    %243 = vrot.lane.b32.xlu0 %v131, 120
    %v244 = vpop.permute.xlu0 %243
    %245 = vrot.lane.b32.xlu0 %v131, 88
    %v246 = vpop.permute.xlu0 %245
    %v248 = vsel %vm135, %v244, 0
    %v251 = vsel %vm135, %v246, 0
    %253 = vmatprep.subr.bf16.mxu0 0
    %254 = vmatpush1.bf16.xpose.msra.mxu0 0
    %255 = vmatprep.subr.bf16.mxu0 0
    %256 = vmatpush1.bf16.xpose.msra.mxu0 0
    %257 = vmatprep.subr.bf16.mxu0 0
    %258 = vmatpush1.bf16.xpose.msra.mxu0 0
    %259 = vmatprep.subr.bf16.mxu0 0
    %260 = vmatpush1.bf16.xpose.msra.mxu0 0
    %261 = vmatprep.subr.bf16.mxu0 0
    %262 = vmatpush1.bf16.xpose.msra.mxu0 0
    %263 = vmatprep.subr.bf16.mxu0 0
    %264 = vmatpush1.bf16.xpose.msra.mxu0 0
    %265 = vmatprep.subr.bf16.mxu0 0
    %266 = vmatpush1.bf16.xpose.msra.mxu0 0
    %267 = vmatprep.subr.bf16.mxu0 0
    %268 = vmatpush1.bf16.xpose.msra.mxu0 %v251
    %269 = vmatprep.subr.bf16.mxu0 0
    %270 = vmatpush2.bf16.xpose.msra.mxu0 0
    %271 = vmatprep.subr.bf16.mxu0 0
    %272 = vmatpush2.bf16.xpose.msra.mxu0 0
    %273 = vmatprep.subr.bf16.mxu0 0
    %274 = vmatpush2.bf16.xpose.msra.mxu0 0
    %275 = vmatprep.subr.bf16.mxu0 0
    %276 = vmatpush2.bf16.xpose.msra.mxu0 0
    %277 = vmatprep.subr.bf16.mxu0 0
    %278 = vmatpush2.bf16.xpose.msra.mxu0 0
    %279 = vmatprep.subr.bf16.mxu0 0
    %280 = vmatpush2.bf16.xpose.msra.mxu0 0
    %281 = vmatprep.subr.bf16.mxu0 0
    %282 = vmatpush2.bf16.xpose.msra.mxu0 0
    %283 = vmatprep.subr.bf16.mxu0 0
    %284 = vmatpush2.bf16.xpose.msra.mxu0 0
    %285 = vmatprep.mubr.bf16.mxu0 0
    %286 = vmatmul.mubr.bf16.gmra.mxu0 %v248
    %v287 = vpop.f32.mrf.mxu0
    %v288 = vadd.f32 0.0, %v287
    %v289 = vpop.f32.mrf.mxu0
    %v290 = vpop.f32.mrf.mxu0
    %v291 = vpop.f32.mrf.mxu0
    %292 = vdwg.mxu0
    %v293 = vsel %vm135, %v288, -inf
    %294 = vmax.xlane.f32.xlu0 %v293
    %v295 = vpop.xlane.xlu0 %294
    %v296 = vsub.f32 %v288, %v295
    %v297 = vmul.f32 %v296, 1.442695
    %v298 = vpow.pop %v297
    %v299 = vsel %vm135, %v298, 0.0
    %300 = vadd.xlane.f32.xlu0 %v299
    %v301 = vpop.xlane.xlu0 %300
    %v302 = vrcp.pop %v301
    %v303 = vmul.f32 %v298, %v302
    %v304 = vpack.c.bf16 %v303, %v303
    %305 = vrot.lane.b32.xlu0 %v131, 56
    %v306 = vpop.permute.xlu0 %305
    %v308 = vsel %vm135, %v304, 0
    %v311 = vsel %vm199, %v306, 0
    %313 = vmatprep.subr.bf16.mxu0 0
    %314 = vmatpush1.bf16.msra.mxu0 0
    %315 = vmatprep.subr.bf16.mxu0 0
    %316 = vmatpush1.bf16.msra.mxu0 0
    %317 = vmatprep.subr.bf16.mxu0 0
    %318 = vmatpush1.bf16.msra.mxu0 0
    %319 = vmatprep.subr.bf16.mxu0 0
    %320 = vmatpush1.bf16.msra.mxu0 0
    %321 = vmatprep.subr.bf16.mxu0 0
    %322 = vmatpush1.bf16.msra.mxu0 0
    %323 = vmatprep.subr.bf16.mxu0 0
    %324 = vmatpush1.bf16.msra.mxu0 0
    %325 = vmatprep.subr.bf16.mxu0 0
    %326 = vmatpush1.bf16.msra.mxu0 0
    %327 = vmatprep.subr.bf16.mxu0 0
    %328 = vmatpush1.bf16.msra.mxu0 %v311
    %329 = vmatprep.subr.bf16.mxu0 0
    %330 = vmatpush2.bf16.msra.mxu0 0
    %331 = vmatprep.subr.bf16.mxu0 0
    %332 = vmatpush2.bf16.msra.mxu0 0
    %333 = vmatprep.subr.bf16.mxu0 0
    %334 = vmatpush2.bf16.msra.mxu0 0
    %335 = vmatprep.subr.bf16.mxu0 0
    %336 = vmatpush2.bf16.msra.mxu0 0
    %337 = vmatprep.subr.bf16.mxu0 0
    %338 = vmatpush2.bf16.msra.mxu0 0
    %339 = vmatprep.subr.bf16.mxu0 0
    %340 = vmatpush2.bf16.msra.mxu0 0
    %341 = vmatprep.subr.bf16.mxu0 0
    %342 = vmatpush2.bf16.msra.mxu0 0
    %343 = vmatprep.subr.bf16.mxu0 0
    %344 = vmatpush2.bf16.msra.mxu0 0
    %345 = vmatprep.mubr.bf16.mxu0 0
    %346 = vmatmul.mubr.bf16.gmra.mxu0 %v308
    %v347 = vpop.f32.mrf.mxu0
    %v348 = vadd.f32 0.0, %v347
    %v349 = vpop.f32.mrf.mxu0
    %v350 = vpop.f32.mrf.mxu0
    %v351 = vpop.f32.mrf.mxu0
    %352 = vdwg.mxu0
    %353 = vrot.lane.b32.xlu0 %v131, 112
    %v354 = vpop.permute.xlu0 %353
    %355 = vrot.lane.b32.xlu0 %v131, 80
    %v356 = vpop.permute.xlu0 %355
    %v358 = vsel %vm135, %v354, 0
    %v361 = vsel %vm135, %v356, 0
    %363 = vmatprep.subr.bf16.mxu0 0
    %364 = vmatpush1.bf16.xpose.msra.mxu0 0
    %365 = vmatprep.subr.bf16.mxu0 0
    %366 = vmatpush1.bf16.xpose.msra.mxu0 0
    %367 = vmatprep.subr.bf16.mxu0 0
    %368 = vmatpush1.bf16.xpose.msra.mxu0 0
    %369 = vmatprep.subr.bf16.mxu0 0
    %370 = vmatpush1.bf16.xpose.msra.mxu0 0
    %371 = vmatprep.subr.bf16.mxu0 0
    %372 = vmatpush1.bf16.xpose.msra.mxu0 0
    %373 = vmatprep.subr.bf16.mxu0 0
    %374 = vmatpush1.bf16.xpose.msra.mxu0 0
    %375 = vmatprep.subr.bf16.mxu0 0
    %376 = vmatpush1.bf16.xpose.msra.mxu0 0
    %377 = vmatprep.subr.bf16.mxu0 0
    %378 = vmatpush1.bf16.xpose.msra.mxu0 %v361
    %379 = vmatprep.subr.bf16.mxu0 0
    %380 = vmatpush2.bf16.xpose.msra.mxu0 0
    %381 = vmatprep.subr.bf16.mxu0 0
    %382 = vmatpush2.bf16.xpose.msra.mxu0 0
    %383 = vmatprep.subr.bf16.mxu0 0
    %384 = vmatpush2.bf16.xpose.msra.mxu0 0
    %385 = vmatprep.subr.bf16.mxu0 0
    %386 = vmatpush2.bf16.xpose.msra.mxu0 0
    %387 = vmatprep.subr.bf16.mxu0 0
    %388 = vmatpush2.bf16.xpose.msra.mxu0 0
    %389 = vmatprep.subr.bf16.mxu0 0
    %390 = vmatpush2.bf16.xpose.msra.mxu0 0
    %391 = vmatprep.subr.bf16.mxu0 0
    %392 = vmatpush2.bf16.xpose.msra.mxu0 0
    %393 = vmatprep.subr.bf16.mxu0 0
    %394 = vmatpush2.bf16.xpose.msra.mxu0 0
    %395 = vmatprep.mubr.bf16.mxu0 0
    %396 = vmatmul.mubr.bf16.gmra.mxu0 %v358
    %v397 = vpop.f32.mrf.mxu0
    %v398 = vadd.f32 0.0, %v397
    %v399 = vpop.f32.mrf.mxu0
    %v400 = vpop.f32.mrf.mxu0
    %v401 = vpop.f32.mrf.mxu0
    %402 = vdwg.mxu0
    %v403 = vsel %vm135, %v398, -inf
    %404 = vmax.xlane.f32.xlu0 %v403
    %v405 = vpop.xlane.xlu0 %404
    %v406 = vsub.f32 %v398, %v405
    %v407 = vmul.f32 %v406, 1.442695
    %v408 = vpow.pop %v407
    %v409 = vsel %vm135, %v408, 0.0
    %410 = vadd.xlane.f32.xlu0 %v409
    %v411 = vpop.xlane.xlu0 %410
    %v412 = vrcp.pop %v411
    %v413 = vmul.f32 %v408, %v412
    %v414 = vpack.c.bf16 %v413, %v413
    %415 = vrot.lane.b32.xlu0 %v131, 48
    %v416 = vpop.permute.xlu0 %415
    %v418 = vsel %vm135, %v414, 0
    %v421 = vsel %vm199, %v416, 0
    %423 = vmatprep.subr.bf16.mxu0 0
    %424 = vmatpush1.bf16.msra.mxu0 0
    %425 = vmatprep.subr.bf16.mxu0 0
    %426 = vmatpush1.bf16.msra.mxu0 0
    %427 = vmatprep.subr.bf16.mxu0 0
    %428 = vmatpush1.bf16.msra.mxu0 0
    %429 = vmatprep.subr.bf16.mxu0 0
    %430 = vmatpush1.bf16.msra.mxu0 0
    %431 = vmatprep.subr.bf16.mxu0 0
    %432 = vmatpush1.bf16.msra.mxu0 0
    %433 = vmatprep.subr.bf16.mxu0 0
    %434 = vmatpush1.bf16.msra.mxu0 0
    %435 = vmatprep.subr.bf16.mxu0 0
    %436 = vmatpush1.bf16.msra.mxu0 0
    %437 = vmatprep.subr.bf16.mxu0 0
    %438 = vmatpush1.bf16.msra.mxu0 %v421
    %439 = vmatprep.subr.bf16.mxu0 0
    %440 = vmatpush2.bf16.msra.mxu0 0
    %441 = vmatprep.subr.bf16.mxu0 0
    %442 = vmatpush2.bf16.msra.mxu0 0
    %443 = vmatprep.subr.bf16.mxu0 0
    %444 = vmatpush2.bf16.msra.mxu0 0
    %445 = vmatprep.subr.bf16.mxu0 0
    %446 = vmatpush2.bf16.msra.mxu0 0
    %447 = vmatprep.subr.bf16.mxu0 0
    %448 = vmatpush2.bf16.msra.mxu0 0
    %449 = vmatprep.subr.bf16.mxu0 0
    %450 = vmatpush2.bf16.msra.mxu0 0
    %451 = vmatprep.subr.bf16.mxu0 0
    %452 = vmatpush2.bf16.msra.mxu0 0
    %453 = vmatprep.subr.bf16.mxu0 0
    %454 = vmatpush2.bf16.msra.mxu0 0
    %455 = vmatprep.mubr.bf16.mxu0 0
    %456 = vmatmul.mubr.bf16.gmra.mxu0 %v418
    %v457 = vpop.f32.mrf.mxu0
    %v458 = vadd.f32 0.0, %v457
    %v459 = vpop.f32.mrf.mxu0
    %v460 = vpop.f32.mrf.mxu0
    %v461 = vpop.f32.mrf.mxu0
    %462 = vdwg.mxu0
    %463 = vrot.lane.b32.xlu0 %v131, 104
    %v464 = vpop.permute.xlu0 %463
    %465 = vrot.lane.b32.xlu0 %v131, 72
    %v466 = vpop.permute.xlu0 %465
    %v468 = vsel %vm135, %v464, 0
    %v471 = vsel %vm135, %v466, 0
    %473 = vmatprep.subr.bf16.mxu0 0
    %474 = vmatpush1.bf16.xpose.msra.mxu0 0
    %475 = vmatprep.subr.bf16.mxu0 0
    %476 = vmatpush1.bf16.xpose.msra.mxu0 0
    %477 = vmatprep.subr.bf16.mxu0 0
    %478 = vmatpush1.bf16.xpose.msra.mxu0 0
    %479 = vmatprep.subr.bf16.mxu0 0
    %480 = vmatpush1.bf16.xpose.msra.mxu0 0
    %481 = vmatprep.subr.bf16.mxu0 0
    %482 = vmatpush1.bf16.xpose.msra.mxu0 0
    %483 = vmatprep.subr.bf16.mxu0 0
    %484 = vmatpush1.bf16.xpose.msra.mxu0 0
    %485 = vmatprep.subr.bf16.mxu0 0
    %486 = vmatpush1.bf16.xpose.msra.mxu0 0
    %487 = vmatprep.subr.bf16.mxu0 0
    %488 = vmatpush1.bf16.xpose.msra.mxu0 %v471
    %489 = vmatprep.subr.bf16.mxu0 0
    %490 = vmatpush2.bf16.xpose.msra.mxu0 0
    %491 = vmatprep.subr.bf16.mxu0 0
    %492 = vmatpush2.bf16.xpose.msra.mxu0 0
    %493 = vmatprep.subr.bf16.mxu0 0
    %494 = vmatpush2.bf16.xpose.msra.mxu0 0
    %495 = vmatprep.subr.bf16.mxu0 0
    %496 = vmatpush2.bf16.xpose.msra.mxu0 0
    %497 = vmatprep.subr.bf16.mxu0 0
    %498 = vmatpush2.bf16.xpose.msra.mxu0 0
    %499 = vmatprep.subr.bf16.mxu0 0
    %500 = vmatpush2.bf16.xpose.msra.mxu0 0
    %501 = vmatprep.subr.bf16.mxu0 0
    %502 = vmatpush2.bf16.xpose.msra.mxu0 0
    %503 = vmatprep.subr.bf16.mxu0 0
    %504 = vmatpush2.bf16.xpose.msra.mxu0 0
    %505 = vmatprep.mubr.bf16.mxu0 0
    %506 = vmatmul.mubr.bf16.gmra.mxu0 %v468
    %v507 = vpop.f32.mrf.mxu0
    %v508 = vadd.f32 0.0, %v507
    %v509 = vpop.f32.mrf.mxu0
    %v510 = vpop.f32.mrf.mxu0
    %v511 = vpop.f32.mrf.mxu0
    %512 = vdwg.mxu0
    %v513 = vsel %vm135, %v508, -inf
    %514 = vmax.xlane.f32.xlu0 %v513
    %v515 = vpop.xlane.xlu0 %514
    %v516 = vsub.f32 %v508, %v515
    %v517 = vmul.f32 %v516, 1.442695
    %v518 = vpow.pop %v517
    %v519 = vsel %vm135, %v518, 0.0
    %520 = vadd.xlane.f32.xlu0 %v519
    %v521 = vpop.xlane.xlu0 %520
    %v522 = vrcp.pop %v521
    %v523 = vmul.f32 %v518, %v522
    %v524 = vpack.c.bf16 %v523, %v523
    %525 = vrot.lane.b32.xlu0 %v131, 40
    %v526 = vpop.permute.xlu0 %525
    %v528 = vsel %vm135, %v524, 0
    %v531 = vsel %vm199, %v526, 0
    %533 = vmatprep.subr.bf16.mxu0 0
    %534 = vmatpush1.bf16.msra.mxu0 0
    %535 = vmatprep.subr.bf16.mxu0 0
    %536 = vmatpush1.bf16.msra.mxu0 0
    %537 = vmatprep.subr.bf16.mxu0 0
    %538 = vmatpush1.bf16.msra.mxu0 0
    %539 = vmatprep.subr.bf16.mxu0 0
    %540 = vmatpush1.bf16.msra.mxu0 0
    %541 = vmatprep.subr.bf16.mxu0 0
    %542 = vmatpush1.bf16.msra.mxu0 0
    %543 = vmatprep.subr.bf16.mxu0 0
    %544 = vmatpush1.bf16.msra.mxu0 0
    %545 = vmatprep.subr.bf16.mxu0 0
    %546 = vmatpush1.bf16.msra.mxu0 0
    %547 = vmatprep.subr.bf16.mxu0 0
    %548 = vmatpush1.bf16.msra.mxu0 %v531
    %549 = vmatprep.subr.bf16.mxu0 0
    %550 = vmatpush2.bf16.msra.mxu0 0
    %551 = vmatprep.subr.bf16.mxu0 0
    %552 = vmatpush2.bf16.msra.mxu0 0
    %553 = vmatprep.subr.bf16.mxu0 0
    %554 = vmatpush2.bf16.msra.mxu0 0
    %555 = vmatprep.subr.bf16.mxu0 0
    %556 = vmatpush2.bf16.msra.mxu0 0
    %557 = vmatprep.subr.bf16.mxu0 0
    %558 = vmatpush2.bf16.msra.mxu0 0
    %559 = vmatprep.subr.bf16.mxu0 0
    %560 = vmatpush2.bf16.msra.mxu0 0
    %561 = vmatprep.subr.bf16.mxu0 0
    %562 = vmatpush2.bf16.msra.mxu0 0
    %563 = vmatprep.subr.bf16.mxu0 0
    %564 = vmatpush2.bf16.msra.mxu0 0
    %565 = vmatprep.mubr.bf16.mxu0 0
    %566 = vmatmul.mubr.bf16.gmra.mxu0 %v528
    %v567 = vpop.f32.mrf.mxu0
    %v568 = vadd.f32 0.0, %v567
    %v569 = vpop.f32.mrf.mxu0
    %v570 = vpop.f32.mrf.mxu0
    %v571 = vpop.f32.mrf.mxu0
    %572 = vdwg.mxu0
    %574 = vrot.lane.b32.xlu0 %v348, 8
    %v575 = vpop.permute.xlu0 %574
    %578 = vrot.lane.b32.xlu0 %v458, 16
    %v579 = vpop.permute.xlu0 %578
    %582 = vrot.lane.b32.xlu0 %v568, 24
    %v583 = vpop.permute.xlu0 %582
    %v585 = vsel %vm135, %v238, %v575
    %vm586 = vcmask 130048
    %v587 = vsel %vm586, %v585, %v579
    %vm588 = vcmask 195584
    %v589 = vsel %vm588, %v587, %v583
    %v590 = vpack.c.bf16 %v128, %v128
    %592 = vrot.lane.b32.xlu0 %v590, 96
    %v593 = vpop.permute.xlu0 %592
    %v595 = vsel %vm135, %v590, 0
    %v598 = vsel %vm135, %v593, 0
    %600 = vmatprep.subr.bf16.mxu0 0
    %601 = vmatpush1.bf16.xpose.msra.mxu0 0
    %602 = vmatprep.subr.bf16.mxu0 0
    %603 = vmatpush1.bf16.xpose.msra.mxu0 0
    %604 = vmatprep.subr.bf16.mxu0 0
    %605 = vmatpush1.bf16.xpose.msra.mxu0 0
    %606 = vmatprep.subr.bf16.mxu0 0
    %607 = vmatpush1.bf16.xpose.msra.mxu0 0
    %608 = vmatprep.subr.bf16.mxu0 0
    %609 = vmatpush1.bf16.xpose.msra.mxu0 0
    %610 = vmatprep.subr.bf16.mxu0 0
    %611 = vmatpush1.bf16.xpose.msra.mxu0 0
    %612 = vmatprep.subr.bf16.mxu0 0
    %613 = vmatpush1.bf16.xpose.msra.mxu0 0
    %614 = vmatprep.subr.bf16.mxu0 0
    %615 = vmatpush1.bf16.xpose.msra.mxu0 %v598
    %616 = vmatprep.subr.bf16.mxu0 0
    %617 = vmatpush2.bf16.xpose.msra.mxu0 0
    %618 = vmatprep.subr.bf16.mxu0 0
    %619 = vmatpush2.bf16.xpose.msra.mxu0 0
    %620 = vmatprep.subr.bf16.mxu0 0
    %621 = vmatpush2.bf16.xpose.msra.mxu0 0
    %622 = vmatprep.subr.bf16.mxu0 0
    %623 = vmatpush2.bf16.xpose.msra.mxu0 0
    %624 = vmatprep.subr.bf16.mxu0 0
    %625 = vmatpush2.bf16.xpose.msra.mxu0 0
    %626 = vmatprep.subr.bf16.mxu0 0
    %627 = vmatpush2.bf16.xpose.msra.mxu0 0
    %628 = vmatprep.subr.bf16.mxu0 0
    %629 = vmatpush2.bf16.xpose.msra.mxu0 0
    %630 = vmatprep.subr.bf16.mxu0 0
    %631 = vmatpush2.bf16.xpose.msra.mxu0 0
    %632 = vmatprep.mubr.bf16.mxu0 0
    %633 = vmatmul.mubr.bf16.gmra.mxu0 %v595
    %v634 = vpop.f32.mrf.mxu0
    %v635 = vadd.f32 0.0, %v634
    %v636 = vpop.f32.mrf.mxu0
    %v637 = vpop.f32.mrf.mxu0
    %v638 = vpop.f32.mrf.mxu0
    %639 = vdwg.mxu0
    %v640 = vsel %vm135, %v635, -inf
    %641 = vmax.xlane.f32.xlu0 %v640
    %v642 = vpop.xlane.xlu0 %641
    %v643 = vsub.f32 %v635, %v642
    %v644 = vmul.f32 %v643, 1.442695
    %v645 = vpow.pop %v644
    %v646 = vsel %vm135, %v645, 0.0
    %647 = vadd.xlane.f32.xlu0 %v646
    %v648 = vpop.xlane.xlu0 %647
    %v649 = vrcp.pop %v648
    %v650 = vmul.f32 %v645, %v649
    %v651 = vpack.c.bf16 %v650, %v650
    %652 = vrot.lane.b32.xlu0 %v590, 64
    %v653 = vpop.permute.xlu0 %652
    %v655 = vsel %vm135, %v651, 0
    %v658 = vsel %vm199, %v653, 0
    %660 = vmatprep.subr.bf16.mxu0 0
    %661 = vmatpush1.bf16.msra.mxu0 0
    %662 = vmatprep.subr.bf16.mxu0 0
    %663 = vmatpush1.bf16.msra.mxu0 0
    %664 = vmatprep.subr.bf16.mxu0 0
    %665 = vmatpush1.bf16.msra.mxu0 0
    %666 = vmatprep.subr.bf16.mxu0 0
    %667 = vmatpush1.bf16.msra.mxu0 0
    %668 = vmatprep.subr.bf16.mxu0 0
    %669 = vmatpush1.bf16.msra.mxu0 0
    %670 = vmatprep.subr.bf16.mxu0 0
    %671 = vmatpush1.bf16.msra.mxu0 0
    %672 = vmatprep.subr.bf16.mxu0 0
    %673 = vmatpush1.bf16.msra.mxu0 0
    %674 = vmatprep.subr.bf16.mxu0 0
    %675 = vmatpush1.bf16.msra.mxu0 %v658
    %676 = vmatprep.subr.bf16.mxu0 0
    %677 = vmatpush2.bf16.msra.mxu0 0
    %678 = vmatprep.subr.bf16.mxu0 0
    %679 = vmatpush2.bf16.msra.mxu0 0
    %680 = vmatprep.subr.bf16.mxu0 0
    %681 = vmatpush2.bf16.msra.mxu0 0
    %682 = vmatprep.subr.bf16.mxu0 0
    %683 = vmatpush2.bf16.msra.mxu0 0
    %684 = vmatprep.subr.bf16.mxu0 0
    %685 = vmatpush2.bf16.msra.mxu0 0
    %686 = vmatprep.subr.bf16.mxu0 0
    %687 = vmatpush2.bf16.msra.mxu0 0
    %688 = vmatprep.subr.bf16.mxu0 0
    %689 = vmatpush2.bf16.msra.mxu0 0
    %690 = vmatprep.subr.bf16.mxu0 0
    %691 = vmatpush2.bf16.msra.mxu0 0
    %692 = vmatprep.mubr.bf16.mxu0 0
    %693 = vmatmul.mubr.bf16.gmra.mxu0 %v655
    %v694 = vpop.f32.mrf.mxu0
    %v695 = vadd.f32 0.0, %v694
    %v696 = vpop.f32.mrf.mxu0
    %v697 = vpop.f32.mrf.mxu0
    %v698 = vpop.f32.mrf.mxu0
    %699 = vdwg.mxu0
    %700 = vrot.lane.b32.xlu0 %v590, 120
    %v701 = vpop.permute.xlu0 %700
    %702 = vrot.lane.b32.xlu0 %v590, 88
    %v703 = vpop.permute.xlu0 %702
    %v705 = vsel %vm135, %v701, 0
    %v708 = vsel %vm135, %v703, 0
    %710 = vmatprep.subr.bf16.mxu0 0
    %711 = vmatpush1.bf16.xpose.msra.mxu0 0
    %712 = vmatprep.subr.bf16.mxu0 0
    %713 = vmatpush1.bf16.xpose.msra.mxu0 0
    %714 = vmatprep.subr.bf16.mxu0 0
    %715 = vmatpush1.bf16.xpose.msra.mxu0 0
    %716 = vmatprep.subr.bf16.mxu0 0
    %717 = vmatpush1.bf16.xpose.msra.mxu0 0
    %718 = vmatprep.subr.bf16.mxu0 0
    %719 = vmatpush1.bf16.xpose.msra.mxu0 0
    %720 = vmatprep.subr.bf16.mxu0 0
    %721 = vmatpush1.bf16.xpose.msra.mxu0 0
    %722 = vmatprep.subr.bf16.mxu0 0
    %723 = vmatpush1.bf16.xpose.msra.mxu0 0
    %724 = vmatprep.subr.bf16.mxu0 0
    %725 = vmatpush1.bf16.xpose.msra.mxu0 %v708
    %726 = vmatprep.subr.bf16.mxu0 0
    %727 = vmatpush2.bf16.xpose.msra.mxu0 0
    %728 = vmatprep.subr.bf16.mxu0 0
    %729 = vmatpush2.bf16.xpose.msra.mxu0 0
    %730 = vmatprep.subr.bf16.mxu0 0
    %731 = vmatpush2.bf16.xpose.msra.mxu0 0
    %732 = vmatprep.subr.bf16.mxu0 0
    %733 = vmatpush2.bf16.xpose.msra.mxu0 0
    %734 = vmatprep.subr.bf16.mxu0 0
    %735 = vmatpush2.bf16.xpose.msra.mxu0 0
    %736 = vmatprep.subr.bf16.mxu0 0
    %737 = vmatpush2.bf16.xpose.msra.mxu0 0
    %738 = vmatprep.subr.bf16.mxu0 0
    %739 = vmatpush2.bf16.xpose.msra.mxu0 0
    %740 = vmatprep.subr.bf16.mxu0 0
    %741 = vmatpush2.bf16.xpose.msra.mxu0 0
    %742 = vmatprep.mubr.bf16.mxu0 0
    %743 = vmatmul.mubr.bf16.gmra.mxu0 %v705
    %v744 = vpop.f32.mrf.mxu0
    %v745 = vadd.f32 0.0, %v744
    %v746 = vpop.f32.mrf.mxu0
    %v747 = vpop.f32.mrf.mxu0
    %v748 = vpop.f32.mrf.mxu0
    %749 = vdwg.mxu0
    %v750 = vsel %vm135, %v745, -inf
    %751 = vmax.xlane.f32.xlu0 %v750
    %v752 = vpop.xlane.xlu0 %751
    %v753 = vsub.f32 %v745, %v752
    %v754 = vmul.f32 %v753, 1.442695
    %v755 = vpow.pop %v754
    %v756 = vsel %vm135, %v755, 0.0
    %757 = vadd.xlane.f32.xlu0 %v756
    %v758 = vpop.xlane.xlu0 %757
    %v759 = vrcp.pop %v758
    %v760 = vmul.f32 %v755, %v759
    %v761 = vpack.c.bf16 %v760, %v760
    %762 = vrot.lane.b32.xlu0 %v590, 56
    %v763 = vpop.permute.xlu0 %762
    %v765 = vsel %vm135, %v761, 0
    %v768 = vsel %vm199, %v763, 0
    %770 = vmatprep.subr.bf16.mxu0 0
    %771 = vmatpush1.bf16.msra.mxu0 0
    %772 = vmatprep.subr.bf16.mxu0 0
    %773 = vmatpush1.bf16.msra.mxu0 0
    %774 = vmatprep.subr.bf16.mxu0 0
    %775 = vmatpush1.bf16.msra.mxu0 0
    %776 = vmatprep.subr.bf16.mxu0 0
    %777 = vmatpush1.bf16.msra.mxu0 0
    %778 = vmatprep.subr.bf16.mxu0 0
    %779 = vmatpush1.bf16.msra.mxu0 0
    %780 = vmatprep.subr.bf16.mxu0 0
    %781 = vmatpush1.bf16.msra.mxu0 0
    %782 = vmatprep.subr.bf16.mxu0 0
    %783 = vmatpush1.bf16.msra.mxu0 0
    %784 = vmatprep.subr.bf16.mxu0 0
    %785 = vmatpush1.bf16.msra.mxu0 %v768
    %786 = vmatprep.subr.bf16.mxu0 0
    %787 = vmatpush2.bf16.msra.mxu0 0
    %788 = vmatprep.subr.bf16.mxu0 0
    %789 = vmatpush2.bf16.msra.mxu0 0
    %790 = vmatprep.subr.bf16.mxu0 0
    %791 = vmatpush2.bf16.msra.mxu0 0
    %792 = vmatprep.subr.bf16.mxu0 0
    %793 = vmatpush2.bf16.msra.mxu0 0
    %794 = vmatprep.subr.bf16.mxu0 0
    %795 = vmatpush2.bf16.msra.mxu0 0
    %796 = vmatprep.subr.bf16.mxu0 0
    %797 = vmatpush2.bf16.msra.mxu0 0
    %798 = vmatprep.subr.bf16.mxu0 0
    %799 = vmatpush2.bf16.msra.mxu0 0
    %800 = vmatprep.subr.bf16.mxu0 0
    %801 = vmatpush2.bf16.msra.mxu0 0
    %802 = vmatprep.mubr.bf16.mxu0 0
    %803 = vmatmul.mubr.bf16.gmra.mxu0 %v765
    %v804 = vpop.f32.mrf.mxu0
    %v805 = vadd.f32 0.0, %v804
    %v806 = vpop.f32.mrf.mxu0
    %v807 = vpop.f32.mrf.mxu0
    %v808 = vpop.f32.mrf.mxu0
    %809 = vdwg.mxu0
    %810 = vrot.lane.b32.xlu0 %v590, 112
    %v811 = vpop.permute.xlu0 %810
    %812 = vrot.lane.b32.xlu0 %v590, 80
    %v813 = vpop.permute.xlu0 %812
    %v815 = vsel %vm135, %v811, 0
    %v818 = vsel %vm135, %v813, 0
    %820 = vmatprep.subr.bf16.mxu0 0
    %821 = vmatpush1.bf16.xpose.msra.mxu0 0
    %822 = vmatprep.subr.bf16.mxu0 0
    %823 = vmatpush1.bf16.xpose.msra.mxu0 0
    %824 = vmatprep.subr.bf16.mxu0 0
    %825 = vmatpush1.bf16.xpose.msra.mxu0 0
    %826 = vmatprep.subr.bf16.mxu0 0
    %827 = vmatpush1.bf16.xpose.msra.mxu0 0
    %828 = vmatprep.subr.bf16.mxu0 0
    %829 = vmatpush1.bf16.xpose.msra.mxu0 0
    %830 = vmatprep.subr.bf16.mxu0 0
    %831 = vmatpush1.bf16.xpose.msra.mxu0 0
    %832 = vmatprep.subr.bf16.mxu0 0
    %833 = vmatpush1.bf16.xpose.msra.mxu0 0
    %834 = vmatprep.subr.bf16.mxu0 0
    %835 = vmatpush1.bf16.xpose.msra.mxu0 %v818
    %836 = vmatprep.subr.bf16.mxu0 0
    %837 = vmatpush2.bf16.xpose.msra.mxu0 0
    %838 = vmatprep.subr.bf16.mxu0 0
    %839 = vmatpush2.bf16.xpose.msra.mxu0 0
    %840 = vmatprep.subr.bf16.mxu0 0
    %841 = vmatpush2.bf16.xpose.msra.mxu0 0
    %842 = vmatprep.subr.bf16.mxu0 0
    %843 = vmatpush2.bf16.xpose.msra.mxu0 0
    %844 = vmatprep.subr.bf16.mxu0 0
    %845 = vmatpush2.bf16.xpose.msra.mxu0 0
    %846 = vmatprep.subr.bf16.mxu0 0
    %847 = vmatpush2.bf16.xpose.msra.mxu0 0
    %848 = vmatprep.subr.bf16.mxu0 0
    %849 = vmatpush2.bf16.xpose.msra.mxu0 0
    %850 = vmatprep.subr.bf16.mxu0 0
    %851 = vmatpush2.bf16.xpose.msra.mxu0 0
    %852 = vmatprep.mubr.bf16.mxu0 0
    %853 = vmatmul.mubr.bf16.gmra.mxu0 %v815
    %v854 = vpop.f32.mrf.mxu0
    %v855 = vadd.f32 0.0, %v854
    %v856 = vpop.f32.mrf.mxu0
    %v857 = vpop.f32.mrf.mxu0
    %v858 = vpop.f32.mrf.mxu0
    %859 = vdwg.mxu0
    %v860 = vsel %vm135, %v855, -inf
    %861 = vmax.xlane.f32.xlu0 %v860
    %v862 = vpop.xlane.xlu0 %861
    %v863 = vsub.f32 %v855, %v862
    %v864 = vmul.f32 %v863, 1.442695
    %v865 = vpow.pop %v864
    %v866 = vsel %vm135, %v865, 0.0
    %867 = vadd.xlane.f32.xlu0 %v866
    %v868 = vpop.xlane.xlu0 %867
    %v869 = vrcp.pop %v868
    %v870 = vmul.f32 %v865, %v869
    %v871 = vpack.c.bf16 %v870, %v870
    %872 = vrot.lane.b32.xlu0 %v590, 48
    %v873 = vpop.permute.xlu0 %872
    %v875 = vsel %vm135, %v871, 0
    %v878 = vsel %vm199, %v873, 0
    %880 = vmatprep.subr.bf16.mxu0 0
    %881 = vmatpush1.bf16.msra.mxu0 0
    %882 = vmatprep.subr.bf16.mxu0 0
    %883 = vmatpush1.bf16.msra.mxu0 0
    %884 = vmatprep.subr.bf16.mxu0 0
    %885 = vmatpush1.bf16.msra.mxu0 0
    %886 = vmatprep.subr.bf16.mxu0 0
    %887 = vmatpush1.bf16.msra.mxu0 0
    %888 = vmatprep.subr.bf16.mxu0 0
    %889 = vmatpush1.bf16.msra.mxu0 0
    %890 = vmatprep.subr.bf16.mxu0 0
    %891 = vmatpush1.bf16.msra.mxu0 0
    %892 = vmatprep.subr.bf16.mxu0 0
    %893 = vmatpush1.bf16.msra.mxu0 0
    %894 = vmatprep.subr.bf16.mxu0 0
    %895 = vmatpush1.bf16.msra.mxu0 %v878
    %896 = vmatprep.subr.bf16.mxu0 0
    %897 = vmatpush2.bf16.msra.mxu0 0
    %898 = vmatprep.subr.bf16.mxu0 0
    %899 = vmatpush2.bf16.msra.mxu0 0
    %900 = vmatprep.subr.bf16.mxu0 0
    %901 = vmatpush2.bf16.msra.mxu0 0
    %902 = vmatprep.subr.bf16.mxu0 0
    %903 = vmatpush2.bf16.msra.mxu0 0
    %904 = vmatprep.subr.bf16.mxu0 0
    %905 = vmatpush2.bf16.msra.mxu0 0
    %906 = vmatprep.subr.bf16.mxu0 0
    %907 = vmatpush2.bf16.msra.mxu0 0
    %908 = vmatprep.subr.bf16.mxu0 0
    %909 = vmatpush2.bf16.msra.mxu0 0
    %910 = vmatprep.subr.bf16.mxu0 0
    %911 = vmatpush2.bf16.msra.mxu0 0
    %912 = vmatprep.mubr.bf16.mxu0 0
    %913 = vmatmul.mubr.bf16.gmra.mxu0 %v875
    %v914 = vpop.f32.mrf.mxu0
    %v915 = vadd.f32 0.0, %v914
    %v916 = vpop.f32.mrf.mxu0
    %v917 = vpop.f32.mrf.mxu0
    %v918 = vpop.f32.mrf.mxu0
    %919 = vdwg.mxu0
    %920 = vrot.lane.b32.xlu0 %v590, 104
    %v921 = vpop.permute.xlu0 %920
    %922 = vrot.lane.b32.xlu0 %v590, 72
    %v923 = vpop.permute.xlu0 %922
    %v925 = vsel %vm135, %v921, 0
    %v928 = vsel %vm135, %v923, 0
    %930 = vmatprep.subr.bf16.mxu0 0
    %931 = vmatpush1.bf16.xpose.msra.mxu0 0
    %932 = vmatprep.subr.bf16.mxu0 0
    %933 = vmatpush1.bf16.xpose.msra.mxu0 0
    %934 = vmatprep.subr.bf16.mxu0 0
    %935 = vmatpush1.bf16.xpose.msra.mxu0 0
    %936 = vmatprep.subr.bf16.mxu0 0
    %937 = vmatpush1.bf16.xpose.msra.mxu0 0
    %938 = vmatprep.subr.bf16.mxu0 0
    %939 = vmatpush1.bf16.xpose.msra.mxu0 0
    %940 = vmatprep.subr.bf16.mxu0 0
    %941 = vmatpush1.bf16.xpose.msra.mxu0 0
    %942 = vmatprep.subr.bf16.mxu0 0
    %943 = vmatpush1.bf16.xpose.msra.mxu0 0
    %944 = vmatprep.subr.bf16.mxu0 0
    %945 = vmatpush1.bf16.xpose.msra.mxu0 %v928
    %946 = vmatprep.subr.bf16.mxu0 0
    %947 = vmatpush2.bf16.xpose.msra.mxu0 0
    %948 = vmatprep.subr.bf16.mxu0 0
    %949 = vmatpush2.bf16.xpose.msra.mxu0 0
    %950 = vmatprep.subr.bf16.mxu0 0
    %951 = vmatpush2.bf16.xpose.msra.mxu0 0
    %952 = vmatprep.subr.bf16.mxu0 0
    %953 = vmatpush2.bf16.xpose.msra.mxu0 0
    %954 = vmatprep.subr.bf16.mxu0 0
    %955 = vmatpush2.bf16.xpose.msra.mxu0 0
    %956 = vmatprep.subr.bf16.mxu0 0
    %957 = vmatpush2.bf16.xpose.msra.mxu0 0
    %958 = vmatprep.subr.bf16.mxu0 0
    %959 = vmatpush2.bf16.xpose.msra.mxu0 0
    %960 = vmatprep.subr.bf16.mxu0 0
    %961 = vmatpush2.bf16.xpose.msra.mxu0 0
    %962 = vmatprep.mubr.bf16.mxu0 0
    %963 = vmatmul.mubr.bf16.gmra.mxu0 %v925
    %v964 = vpop.f32.mrf.mxu0
    %v965 = vadd.f32 0.0, %v964
    %v966 = vpop.f32.mrf.mxu0
    %v967 = vpop.f32.mrf.mxu0
    %v968 = vpop.f32.mrf.mxu0
    %969 = vdwg.mxu0
    %v970 = vsel %vm135, %v965, -inf
    %971 = vmax.xlane.f32.xlu0 %v970
    %v972 = vpop.xlane.xlu0 %971
    %v973 = vsub.f32 %v965, %v972
    %v974 = vmul.f32 %v973, 1.442695
    %v975 = vpow.pop %v974
    %v976 = vsel %vm135, %v975, 0.0
    %977 = vadd.xlane.f32.xlu0 %v976
    %v978 = vpop.xlane.xlu0 %977
    %v979 = vrcp.pop %v978
    %v980 = vmul.f32 %v975, %v979
    %v981 = vpack.c.bf16 %v980, %v980
    %982 = vrot.lane.b32.xlu0 %v590, 40
    %v983 = vpop.permute.xlu0 %982
    %v985 = vsel %vm135, %v981, 0
    %v988 = vsel %vm199, %v983, 0
    %990 = vmatprep.subr.bf16.mxu0 0
    %991 = vmatpush1.bf16.msra.mxu0 0
    %992 = vmatprep.subr.bf16.mxu0 0
    %993 = vmatpush1.bf16.msra.mxu0 0
    %994 = vmatprep.subr.bf16.mxu0 0
    %995 = vmatpush1.bf16.msra.mxu0 0
    %996 = vmatprep.subr.bf16.mxu0 0
    %997 = vmatpush1.bf16.msra.mxu0 0
    %998 = vmatprep.subr.bf16.mxu0 0
    %999 = vmatpush1.bf16.msra.mxu0 0
    %1000 = vmatprep.subr.bf16.mxu0 0
    %1001 = vmatpush1.bf16.msra.mxu0 0
    %1002 = vmatprep.subr.bf16.mxu0 0
    %1003 = vmatpush1.bf16.msra.mxu0 0
    %1004 = vmatprep.subr.bf16.mxu0 0
    %1005 = vmatpush1.bf16.msra.mxu0 %v988
    %1006 = vmatprep.subr.bf16.mxu0 0
    %1007 = vmatpush2.bf16.msra.mxu0 0
    %1008 = vmatprep.subr.bf16.mxu0 0
    %1009 = vmatpush2.bf16.msra.mxu0 0
    %1010 = vmatprep.subr.bf16.mxu0 0
    %1011 = vmatpush2.bf16.msra.mxu0 0
    %1012 = vmatprep.subr.bf16.mxu0 0
    %1013 = vmatpush2.bf16.msra.mxu0 0
    %1014 = vmatprep.subr.bf16.mxu0 0
    %1015 = vmatpush2.bf16.msra.mxu0 0
    %1016 = vmatprep.subr.bf16.mxu0 0
    %1017 = vmatpush2.bf16.msra.mxu0 0
    %1018 = vmatprep.subr.bf16.mxu0 0
    %1019 = vmatpush2.bf16.msra.mxu0 0
    %1020 = vmatprep.subr.bf16.mxu0 0
    %1021 = vmatpush2.bf16.msra.mxu0 0
    %1022 = vmatprep.mubr.bf16.mxu0 0
    %1023 = vmatmul.mubr.bf16.gmra.mxu0 %v985
    %v1024 = vpop.f32.mrf.mxu0
    %v1025 = vadd.f32 0.0, %v1024
    %v1026 = vpop.f32.mrf.mxu0
    %v1027 = vpop.f32.mrf.mxu0
    %v1028 = vpop.f32.mrf.mxu0
    %1029 = vdwg.mxu0
    %1031 = vrot.lane.b32.xlu0 %v805, 8
    %v1032 = vpop.permute.xlu0 %1031
    %1035 = vrot.lane.b32.xlu0 %v915, 16
    %v1036 = vpop.permute.xlu0 %1035
    %1039 = vrot.lane.b32.xlu0 %v1025, 24
    %v1040 = vpop.permute.xlu0 %1039
    %v1042 = vsel %vm135, %v695, %v1032
    %v1043 = vsel %vm586, %v1042, %v1036
    %v1044 = vsel %vm588, %v1043, %v1040
    %v1045 = vpack.c.bf16 %v1044, %v589
    %v1046 = vld [vmem:[#allocation5 + $0x10] sm:$0xf]
    %v1047 = vld [vmem:[#allocation5 + $0x14] sm:$0xf]
    %v1048 = vld [vmem:[#allocation5 + $0x18] sm:$0xf]
    %v1049 = vld [vmem:[#allocation5 + $0x1c] sm:$0xf]
    %v1050 = vlaneseq
    %v1051 = vshrl.u32 %v1050, 7
    %v1052 = vsub.s32 0, %v1051
    %v1053 = vrot.slane %v59, %v1052
    %v1058 = vunpack.c.l.b16 %v1046
    %v1059 = vunpack.c.l.b16 %v1047
    %v1060 = vunpack.c.l.b16 %v1048
    %v1061 = vunpack.c.l.b16 %v1049
    %v1062 = vpack.c.b16 %v1059, %v1058
    %v1063 = vpack.c.b16 %v1061, %v1060
    %v1067 = vsel %vm86, %v1045, 0
    %1069 = vmatprep.subr.bf16.mxu0 0
    %1070 = vmatpush1.bf16.msra.mxu0 0
    %1071 = vmatprep.subr.bf16.mxu0 0
    %1072 = vmatpush1.bf16.msra.mxu0 0
    %1073 = vmatprep.subr.bf16.mxu0 0
    %1074 = vmatpush1.bf16.msra.mxu0 0
    %1075 = vmatprep.subr.bf16.mxu0 0
    %1076 = vmatpush1.bf16.msra.mxu0 0
    %1077 = vmatprep.subr.bf16.mxu0 0
    %1078 = vmatpush1.bf16.msra.mxu0 0
    %1079 = vmatprep.subr.bf16.mxu0 0
    %1080 = vmatpush1.bf16.msra.mxu0 0
    %1081 = vmatprep.subr.bf16.mxu0 0
    %1082 = vmatpush1.bf16.msra.mxu0 %v1063
    %1083 = vmatprep.subr.bf16.mxu0 0
    %1084 = vmatpush1.bf16.msra.mxu0 %v1062
    %1085 = vmatprep.subr.bf16.mxu0 0
    %1086 = vmatpush2.bf16.msra.mxu0 0
    %1087 = vmatprep.subr.bf16.mxu0 0
    %1088 = vmatpush2.bf16.msra.mxu0 0
    %1089 = vmatprep.subr.bf16.mxu0 0
    %1090 = vmatpush2.bf16.msra.mxu0 0
    %1091 = vmatprep.subr.bf16.mxu0 0
    %1092 = vmatpush2.bf16.msra.mxu0 0
    %1093 = vmatprep.subr.bf16.mxu0 0
    %1094 = vmatpush2.bf16.msra.mxu0 0
    %1095 = vmatprep.subr.bf16.mxu0 0
    %1096 = vmatpush2.bf16.msra.mxu0 0
    %1097 = vmatprep.subr.bf16.mxu0 0
    %1098 = vmatpush2.bf16.msra.mxu0 0
    %1099 = vmatprep.subr.bf16.mxu0 0
    %1100 = vmatpush2.bf16.msra.mxu0 0
    %1101 = vmatprep.mubr.bf16.mxu0 0
    %1102 = vmatmul.mubr.bf16.gmra.mxu0 %v1067
    %v1103 = vpop.f32.mrf.mxu0
    %v1104 = vadd.f32 %v1053, %v1103
    %v1105 = vpop.f32.mrf.mxu0
    %v1106 = vpop.f32.mrf.mxu0
    %v1107 = vadd.f32 %v1053, %v1106
    %v1108 = vpop.f32.mrf.mxu0
    %1109 = vdwg.mxu0
    %v1110 = vadd.f32 %v55, %v1104
    %v1111 = vadd.f32 %v56, %v1107
    %v1112 = vsel %vm86, %v1110, 0.0
    %1113 = vadd.xlane.f32.xlu0 %v1112
    %v1114 = vpop.xlane.xlu0 %1113
    %v1115 = vsel %vm86, %v1111, 0.0
    %1116 = vadd.xlane.f32.xlu0 %v1115
    %v1117 = vpop.xlane.xlu0 %1116
    %v1118 = vrcp.pop 32.0
    %v1119 = vmul.f32 %v1114, %v1118
    %v1120 = vmul.f32 %v1117, %v1118
    %v1121 = vsub.f32 %v1110, %v1119
    %v1122 = vsub.f32 %v1111, %v1120
    %v1123 = vmul.f32 %v1121, %v1121
    %v1124 = vmul.f32 %v1122, %v1122
    %v1125 = vsel %vm86, %v1123, 0.0
    %1126 = vadd.xlane.f32.xlu0 %v1125
    %v1127 = vpop.xlane.xlu0 %1126
    %v1128 = vsel %vm86, %v1124, 0.0
    %1129 = vadd.xlane.f32.xlu0 %v1128
    %v1130 = vpop.xlane.xlu0 %1129
    %v1131 = vmul.f32 %v1127, %v1118
    %v1132 = vmul.f32 %v1130, %v1118
    %v1133 = vadd.f32 %v1131, 1e-05
    %v1134 = vadd.f32 %v1132, 1e-05
    %v1135 = vrsqrt.pop %v1133
    %v1136 = vrsqrt.pop %v1134
    %v1137 = vmul.f32 %v1121, %v1135
    %v1138 = vmul.f32 %v1122, %v1136
    %v1139 = vlaneseq
    %v1140 = vshrl.u32 %v1139, 7
    %v1141 = vsub.s32 0, %v1140
    %v1142 = vrot.slane %v62, %v1141
    %v1143 = vmul.f32 %v1137, %v1142
    %v1144 = vmul.f32 %v1138, %v1142
    %v1145 = vlaneseq
    %v1146 = vshrl.u32 %v1145, 7
    %v1147 = vsub.s32 0, %v1146
    %v1148 = vrot.slane %v63, %v1147
    %v1149 = vadd.f32 %v1143, %v1148
    %v1150 = vadd.f32 %v1144, %v1148
    %v1151 = vpack.c.bf16 %v1150, %v1149
    %v1152 = vld [vmem:[#allocation5 + $0x20] sm:$0xf]
    %v1153 = vld [vmem:[#allocation5 + $0x24] sm:$0xf]
    %v1154 = vld [vmem:[#allocation5 + $0x28] sm:$0xf]
    %v1155 = vld [vmem:[#allocation5 + $0x2c] sm:$0xf]
    %v1156 = vlaneseq
    %v1157 = vshrl.u32 %v1156, 7
    %v1158 = vsub.s32 0, %v1157
    %v1159 = vrot.slane %v60, %v1158
    %v1164 = vunpack.c.l.b16 %v1152
    %v1165 = vunpack.c.l.b16 %v1153
    %v1166 = vunpack.c.l.b16 %v1154
    %v1167 = vunpack.c.l.b16 %v1155
    %v1168 = vpack.c.b16 %v1165, %v1164
    %v1169 = vpack.c.b16 %v1167, %v1166
    %v1173 = vsel %vm86, %v1151, 0
    %1175 = vmatprep.subr.bf16.mxu0 0
    %1176 = vmatpush1.bf16.msra.mxu0 0
    %1177 = vmatprep.subr.bf16.mxu0 0
    %1178 = vmatpush1.bf16.msra.mxu0 0
    %1179 = vmatprep.subr.bf16.mxu0 0
    %1180 = vmatpush1.bf16.msra.mxu0 0
    %1181 = vmatprep.subr.bf16.mxu0 0
    %1182 = vmatpush1.bf16.msra.mxu0 0
    %1183 = vmatprep.subr.bf16.mxu0 0
    %1184 = vmatpush1.bf16.msra.mxu0 0
    %1185 = vmatprep.subr.bf16.mxu0 0
    %1186 = vmatpush1.bf16.msra.mxu0 0
    %1187 = vmatprep.subr.bf16.mxu0 0
    %1188 = vmatpush1.bf16.msra.mxu0 %v1169
    %1189 = vmatprep.subr.bf16.mxu0 0
    %1190 = vmatpush1.bf16.msra.mxu0 %v1168
    %1191 = vmatprep.subr.bf16.mxu0 0
    %1192 = vmatpush2.bf16.msra.mxu0 0
    %1193 = vmatprep.subr.bf16.mxu0 0
    %1194 = vmatpush2.bf16.msra.mxu0 0
    %1195 = vmatprep.subr.bf16.mxu0 0
    %1196 = vmatpush2.bf16.msra.mxu0 0
    %1197 = vmatprep.subr.bf16.mxu0 0
    %1198 = vmatpush2.bf16.msra.mxu0 0
    %1199 = vmatprep.subr.bf16.mxu0 0
    %1200 = vmatpush2.bf16.msra.mxu0 0
    %1201 = vmatprep.subr.bf16.mxu0 0
    %1202 = vmatpush2.bf16.msra.mxu0 0
    %1203 = vmatprep.subr.bf16.mxu0 0
    %1204 = vmatpush2.bf16.msra.mxu0 0
    %1205 = vmatprep.subr.bf16.mxu0 0
    %1206 = vmatpush2.bf16.msra.mxu0 0
    %1207 = vmatprep.mubr.bf16.mxu0 0
    %1208 = vmatmul.mubr.bf16.gmra.mxu0 %v1173
    %v1209 = vpop.f32.mrf.mxu0
    %v1210 = vadd.f32 %v1159, %v1209
    %v1211 = vpop.f32.mrf.mxu0
    %v1212 = vpop.f32.mrf.mxu0
    %v1213 = vadd.f32 %v1159, %v1212
    %v1214 = vpop.f32.mrf.mxu0
    %1215 = vdwg.mxu0
    %v1216 = vmax.f32 %v1210, 0.0
    %v1217 = vmax.f32 %v1213, 0.0
    %v1218 = vpack.c.bf16 %v1217, %v1216
    %v1219 = vld [vmem:[#allocation5 + $0x30] sm:$0xf]
    %v1220 = vld [vmem:[#allocation5 + $0x34] sm:$0xf]
    %v1221 = vld [vmem:[#allocation5 + $0x38] sm:$0xf]
    %v1222 = vld [vmem:[#allocation5 + $0x3c] sm:$0xf]
    %v1223 = vld [vmem:[#allocation5 + $0x40] sm:$0xf]
    %v1224 = vld [vmem:[#allocation5 + $0x44] sm:$0xf]
    %v1225 = vld [vmem:[#allocation5 + $0x48] sm:$0xf]
    %v1226 = vld [vmem:[#allocation5 + $0x4c] sm:$0xf]
    %v1227 = vld [vmem:[#allocation5 + $0x50] sm:$0xf]
    %v1228 = vld [vmem:[#allocation5 + $0x54] sm:$0xf]
    %v1229 = vld [vmem:[#allocation5 + $0x58] sm:$0xf]
    %v1230 = vld [vmem:[#allocation5 + $0x5c] sm:$0xf]
    %v1231 = vld [vmem:[#allocation5 + $0x60] sm:$0xf]
    %v1232 = vld [vmem:[#allocation5 + $0x64] sm:$0xf]
    %v1233 = vld [vmem:[#allocation5 + $0x68] sm:$0xf]
    %v1234 = vld [vmem:[#allocation5 + $0x6c] sm:$0xf]
    %v1235 = vlaneseq
    %v1236 = vshrl.u32 %v1235, 7
    %v1237 = vsub.s32 0, %v1236
    %v1238 = vrot.slane %v61, %v1237
    %v1255 = vunpack.c.l.b16 %v1219
    %v1256 = vunpack.c.l.b16 %v1220
    %v1257 = vunpack.c.l.b16 %v1221
    %v1258 = vunpack.c.l.b16 %v1222
    %v1259 = vunpack.c.l.b16 %v1223
    %v1260 = vunpack.c.l.b16 %v1224
    %v1261 = vunpack.c.l.b16 %v1225
    %v1262 = vunpack.c.l.b16 %v1226
    %v1263 = vunpack.c.l.b16 %v1227
    %v1264 = vunpack.c.l.b16 %v1228
    %v1265 = vunpack.c.l.b16 %v1229
    %v1266 = vunpack.c.l.b16 %v1230
    %v1267 = vunpack.c.l.b16 %v1231
    %v1268 = vunpack.c.l.b16 %v1232
    %v1269 = vunpack.c.l.b16 %v1233
    %v1270 = vunpack.c.l.b16 %v1234
    %v1271 = vpack.c.b16 %v1256, %v1255
    %v1272 = vpack.c.b16 %v1258, %v1257
    %v1273 = vpack.c.b16 %v1260, %v1259
    %v1274 = vpack.c.b16 %v1262, %v1261
    %v1275 = vpack.c.b16 %v1264, %v1263
    %v1276 = vpack.c.b16 %v1266, %v1265
    %v1277 = vpack.c.b16 %v1268, %v1267
    %v1278 = vpack.c.b16 %v1270, %v1269
    %1287 = vmatprep.subr.bf16.mxu0 0
    %1288 = vmatpush1.bf16.msra.mxu0 %v1278
    %1289 = vmatprep.subr.bf16.mxu0 0
    %1290 = vmatpush1.bf16.msra.mxu0 %v1277
    %1291 = vmatprep.subr.bf16.mxu0 0
    %1292 = vmatpush1.bf16.msra.mxu0 %v1276
    %1293 = vmatprep.subr.bf16.mxu0 0
    %1294 = vmatpush1.bf16.msra.mxu0 %v1275
    %1295 = vmatprep.subr.bf16.mxu0 0
    %1296 = vmatpush1.bf16.msra.mxu0 %v1274
    %1297 = vmatprep.subr.bf16.mxu0 0
    %1298 = vmatpush1.bf16.msra.mxu0 %v1273
    %1299 = vmatprep.subr.bf16.mxu0 0
    %1300 = vmatpush1.bf16.msra.mxu0 %v1272
    %1301 = vmatprep.subr.bf16.mxu0 0
    %1302 = vmatpush1.bf16.msra.mxu0 %v1271
    %1303 = vmatprep.subr.bf16.mxu0 0
    %1304 = vmatpush2.bf16.msra.mxu0 0
    %1305 = vmatprep.subr.bf16.mxu0 0
    %1306 = vmatpush2.bf16.msra.mxu0 0
    %1307 = vmatprep.subr.bf16.mxu0 0
    %1308 = vmatpush2.bf16.msra.mxu0 0
    %1309 = vmatprep.subr.bf16.mxu0 0
    %1310 = vmatpush2.bf16.msra.mxu0 0
    %1311 = vmatprep.subr.bf16.mxu0 0
    %1312 = vmatpush2.bf16.msra.mxu0 0
    %1313 = vmatprep.subr.bf16.mxu0 0
    %1314 = vmatpush2.bf16.msra.mxu0 0
    %1315 = vmatprep.subr.bf16.mxu0 0
    %1316 = vmatpush2.bf16.msra.mxu0 0
    %1317 = vmatprep.subr.bf16.mxu0 0
    %1318 = vmatpush2.bf16.msra.mxu0 0
    %1319 = vmatprep.mubr.bf16.mxu0 0
    %1320 = vmatmul.mubr.bf16.gmra.mxu0 %v1218
    %v1321 = vpop.f32.mrf.mxu0
    %v1322 = vadd.f32 %v1238, %v1321
    %v1323 = vpop.f32.mrf.mxu0
    %v1324 = vpop.f32.mrf.mxu0
    %v1325 = vadd.f32 %v1238, %v1324
    %v1326 = vpop.f32.mrf.mxu0
    %1327 = vdwg.mxu0
    %v1328 = vadd.f32 %v1149, %v1322
    %v1329 = vadd.f32 %v1150, %v1325
    %v1330 = vsel %vm86, %v1328, 0.0
    %1331 = vadd.xlane.f32.xlu0 %v1330
    %v1332 = vpop.xlane.xlu0 %1331
    %v1333 = vsel %vm86, %v1329, 0.0
    %1334 = vadd.xlane.f32.xlu0 %v1333
    %v1335 = vpop.xlane.xlu0 %1334
    %v1336 = vmul.f32 %v1332, %v1118
    %v1337 = vmul.f32 %v1335, %v1118
    %v1338 = vsub.f32 %v1328, %v1336
    %v1339 = vsub.f32 %v1329, %v1337
    %v1340 = vmul.f32 %v1338, %v1338
    %v1341 = vmul.f32 %v1339, %v1339
    %v1342 = vsel %vm86, %v1340, 0.0
    %1343 = vadd.xlane.f32.xlu0 %v1342
    %v1344 = vpop.xlane.xlu0 %1343
    %v1345 = vsel %vm86, %v1341, 0.0
    %1346 = vadd.xlane.f32.xlu0 %v1345
    %v1347 = vpop.xlane.xlu0 %1346
    %v1348 = vmul.f32 %v1344, %v1118
    %v1349 = vmul.f32 %v1347, %v1118
    %v1350 = vadd.f32 %v1348, 1e-05
    %v1351 = vadd.f32 %v1349, 1e-05
    %v1352 = vrsqrt.pop %v1350
    %v1353 = vrsqrt.pop %v1351
    %v1354 = vmul.f32 %v1338, %v1352
    %v1355 = vmul.f32 %v1339, %v1353
    %v1356 = vlaneseq
    %v1357 = vshrl.u32 %v1356, 7
    %v1358 = vsub.s32 0, %v1357
    %v1359 = vrot.slane %v64, %v1358
    %v1360 = vmul.f32 %v1354, %v1359
    %v1361 = vmul.f32 %v1355, %v1359
    %v1362 = vlaneseq
    %v1363 = vshrl.u32 %v1362, 7
    %v1364 = vsub.s32 0, %v1363
    %v1365 = vrot.slane %v65, %v1364
    %v1366 = vadd.f32 %v1360, %v1365
    %v1367 = vadd.f32 %v1361, %v1365
    %1368 = vst.msk [vmem:[#allocation8] sm:$0xff] %vm86, %v1366
    %1369 = vst.msk [vmem:[#allocation8 + $0x8] sm:$0xff] %vm86, %v1367
    // Predicated region
    $region26: #{tpu_custom_call.1} parent=1 // pred_check
      _
    $region27: #{tpu_custom_call.1} parent=1 // pred_check_branch
      %1371 = sbr.rel (0) target = $region29
    $region28: #{tpu_custom_call.1} parent=1 // pred_region
      %s1373 = ssub.s32 256, 256
      %1374 = vsyncadd [#allocation4], %s1373
      %s1375 = sshll.u32 [#allocation8], 4
      %s1376 = int_to_ptr.vmem [resolvable:$true] %s1375
      %1381 = dma.vmem_to_hbm [thread:$0]  %s1376, 256, %s3, [#allocation4], 128, 128, 8
    $region29: #{tpu_custom_call.1} parent=1 // pred_fallthru
      _
    // Predicated region
    $region30: #{tpu_custom_call.1} parent=1 // pred_check
      _
    $region31: #{tpu_custom_call.1} parent=1 // pred_check_branch
      %1383 = sbr.rel (0) target = $region33
    $region32: #{tpu_custom_call.1} parent=1 // pred_region
      %1384 = dma.done [#allocation4], 256
    $region33: #{tpu_custom_call.1} parent=1 // pred_fallthru
      _
    %1385 = vsyncpa [#allocation3], 1
    %1386 = vsyncpa [#allocation6], 1
    %1387 = vsyncpa [#allocation4], 1

</llo_original>
